<compile_context>
chip_gen: v6e
topology: v6e:2x2x1
jax: 0.10.0
libtpu: 0.0.40
codegen_flags: <defaults>
</compile_context>

<pallas_src>
import functools

import jax
import jax.numpy as jnp
from jax.experimental import pallas as pl
from jax.experimental.pallas import tpu as pltpu

_LANE = 128  # logits are written lane-dense ([B*K, 128]) then sliced in the wrapper


def _round8(x):
    return -(-x // 8) * 8


# ----------------------------------------------------------------------------
# Packed-parameter layout: one [R, H] f32 array holds both towers'
# (conv W [F,H], conv b [1,H], proj W [H,H], proj b [1,H]); every slice start
# is 8-row (sublane) aligned so in-kernel static ref slices are clean loads.
# ----------------------------------------------------------------------------
def _param_layout(f_src, f_tgt, h):
    off, o = {}, 0
    for name, rows in (("src_w", f_src), ("src_b", 1), ("src_wp", h), ("src_bp", 1),
                       ("tgt_w", f_tgt), ("tgt_b", 1), ("tgt_wp", h), ("tgt_bp", 1)):
        off[name] = o
        o += _round8(rows)
    return off, o


def pack_params(params, f_src, f_tgt, h):
    """Pack both towers' parameters into a single [R, H] f32 array (one DMA)."""
    off, total = _param_layout(f_src, f_tgt, h)
    pack = jnp.zeros((total, h), jnp.float32)
    parts = dict(zip(("src_w", "src_b", "src_wp", "src_bp"), params["src"]))
    parts.update(zip(("tgt_w", "tgt_b", "tgt_wp", "tgt_bp"), params["tgt"]))
    for name, arr in parts.items():
        pack = pack.at[off[name]:off[name] + arr.shape[0], :].set(arr)
    return pack


# ----------------------------------------------------------------------------
# In-kernel helpers (operate on loaded VMEM values / ref views).
# ----------------------------------------------------------------------------
def _tower(adj_ref, feat_ref, w, b, wp, bp, *, weight_first):
    """DenseGraphConv(norm='both') + bias + (eval) dropout + Linear proj."""
    adj = adj_ref[...].astype(jnp.float32)
    feat = feat_ref[...].astype(jnp.float32)
    n = adj.shape[0]

    # Degree sums on the MXU: bf16 is exact for the 0/1 adjacency and for the
    # ones vectors, accumulation is f32 -> exact integer degrees, XLU stays
    # free, and the results land directly in their natural layouts.
    adj_b = adj.astype(jnp.bfloat16)
    col_deg = jnp.dot(jnp.ones((1, n), jnp.bfloat16), adj_b,
                      preferred_element_type=jnp.float32)            # [1, N]
    row_deg = jnp.dot(adj_b, jnp.ones((n, 1), jnp.bfloat16),
                      preferred_element_type=jnp.float32)            # [N, 1]
    col_scale = jax.lax.rsqrt(jnp.maximum(col_deg, 1.0))             # [1, N]
    row_scale = jax.lax.rsqrt(jnp.maximum(row_deg, 1.0))             # [N, 1]

    # Source-side norm folded into adj columns (single layout-natural [N,N]
    # broadcast multiply); dst-side norm applied to the small [N,H] result.
    adj_n = adj * col_scale

    if weight_first:
        # in_feats > out_feats: multiply by W first, then aggregate (DGL rule).
        h0 = jnp.dot(feat, w, preferred_element_type=jnp.float32)
        h0 = jnp.dot(adj_n, h0, preferred_element_type=jnp.float32)
    else:
        h0 = jnp.dot(adj_n, feat, preferred_element_type=jnp.float32)
        h0 = jnp.dot(h0, w, preferred_element_type=jnp.float32)
    h0 = h0 * row_scale + b                      # dst norm, then conv bias
    # Dropout(p=0.2) is identity in eval mode.
    return jnp.dot(h0, wp, preferred_element_type=jnp.float32) + bp  # proj


def _gdssm_kernel(adj_s_ref, feat_s_ref, adj_t_ref, feat_t_ref,
                  params_ref, idx_ref, out_ref,
                  *, off, f_src, f_tgt, h_dim,
                  src_weight_first, tgt_weight_first):
    # Unpack the parameter slab (static, 8-row-aligned ref slices).
    sw = params_ref[off["src_w"]:off["src_w"] + f_src, :]
    sb = params_ref[off["src_b"]:off["src_b"] + 1, :]
    swp = params_ref[off["src_wp"]:off["src_wp"] + h_dim, :]
    sbp = params_ref[off["src_bp"]:off["src_bp"] + 1, :]
    tw = params_ref[off["tgt_w"]:off["tgt_w"] + f_tgt, :]
    tb = params_ref[off["tgt_b"]:off["tgt_b"] + 1, :]
    twp = params_ref[off["tgt_wp"]:off["tgt_wp"] + h_dim, :]
    tbp = params_ref[off["tgt_bp"]:off["tgt_bp"] + 1, :]

    src_h = _tower(adj_s_ref, feat_s_ref, sw, sb, swp, sbp,
                   weight_first=src_weight_first)                    # [Ns, H]
    tgt_h = _tower(adj_t_ref, feat_t_ref, tw, tb, twp, tbp,
                   weight_first=tgt_weight_first)                    # [Nt, H]

    idx = idx_ref[...]                          # [BK, 2]: (src row, tgt row)
    bk = idx.shape[0]
    n_src = src_h.shape[0]
    n_tgt = tgt_h.shape[0]

    # Gather-then-rowwise-dot: one-hot MXU gathers of the BK (query, candidate)
    # row pairs; normalize only those rows (not all Nt targets).
    oh_s = (jax.lax.broadcasted_iota(jnp.int32, (bk, n_src), 1)
            == idx[:, 0:1]).astype(jnp.float32)                      # [BK, Ns]
    oh_t = (jax.lax.broadcasted_iota(jnp.int32, (bk, n_tgt), 1)
            == idx[:, 1:2]).astype(jnp.float32)                      # [BK, Nt]
    s_g = jnp.dot(oh_s, src_h, preferred_element_type=jnp.float32)   # [BK, H]
    t_g = jnp.dot(oh_t, tgt_h, preferred_element_type=jnp.float32)   # [BK, H]

    # F.normalize: x / max(||x||, 1e-12) == x * rsqrt(max(||x||^2, 1e-24)).
    eps2 = 1e-24
    s_n = s_g * jax.lax.rsqrt(
        jnp.maximum(jnp.sum(s_g * s_g, axis=1, keepdims=True), eps2))
    t_n = t_g * jax.lax.rsqrt(
        jnp.maximum(jnp.sum(t_g * t_g, axis=1, keepdims=True), eps2))

    # Rowwise cosine: the lane reduction AND the lane broadcast are one MXU
    # matmul against ones[H, 128] -> one unmasked, lane-dense [BK, 128] store.
    prod = s_n * t_n                                                 # [BK, H]
    out_ref[...] = jnp.dot(prod, jnp.ones((h_dim, _LANE), jnp.float32),
                           preferred_element_type=jnp.float32)


# ----------------------------------------------------------------------------
# Wrapper: one fused pallas_call for the whole forward pass.
# ----------------------------------------------------------------------------
def gdssm_forward(packed_params, node_feat_src, adj_src, node_feat_tgt, adj_tgt,
                  src_index, tgts_index):
    b = src_index.shape[0]
    k = tgts_index.shape[1]
    f_src = node_feat_src.shape[1]
    f_tgt = node_feat_tgt.shape[1]
    h = packed_params.shape[1]
    off, total_rows = _param_layout(f_src, f_tgt, h)
    assert packed_params.shape[0] == total_rows, "packed params layout mismatch"
    src_wf = f_src > h                            # static DGL weight-first rule
    tgt_wf = f_tgt > h

    # Merge the two index tensors into ONE [BK, 2] int32 array (one DMA):
    # row b*K + k = (src_index[b], tgts_index[b, k]).  Pad BK to a multiple
    # of 8 sublanes; padded rows gather row 0 and are discarded below.
    bk = b * k
    bk_pad = max(8, _round8(bk))
    idx = jnp.stack(
        [jnp.broadcast_to(src_index.astype(jnp.int32)[:, None], (b, k)),
         tgts_index.astype(jnp.int32)], axis=-1).reshape(bk, 2)
    if bk_pad != bk:
        idx = jnp.concatenate([idx, jnp.zeros((bk_pad - bk, 2), jnp.int32)], 0)

    inputs = (adj_src, node_feat_src, adj_tgt, node_feat_tgt, packed_params, idx)
    in_bytes = sum(int(a.size) * a.dtype.itemsize for a in inputs)
    out_bytes = bk_pad * _LANE * 4
    # Explicit scoped-VMEM budget: 2x (buffers) the real footprint + headroom
    # for in-kernel f32 intermediates; tiny vs. every generation's default.
    vmem_limit = int(2 * (in_bytes + out_bytes) + (2 << 20))

    vmem = pl.BlockSpec(memory_space=pltpu.MemorySpace.VMEM)
    out_pad = pl.pallas_call(
        functools.partial(_gdssm_kernel,
                          off=off, f_src=f_src, f_tgt=f_tgt, h_dim=h,
                          src_weight_first=src_wf, tgt_weight_first=tgt_wf),
        out_shape=jax.ShapeDtypeStruct((bk_pad, _LANE), jnp.float32),
        in_specs=[vmem] * 6,
        out_specs=vmem,
        compiler_params=pltpu.CompilerParams(vmem_limit_bytes=vmem_limit),
    )(*inputs)
    # Every lane of a row holds the same cosine value; take lane 0 -> [B, K].
    return out_pad[:bk, 0].reshape(b, k)


# ----------------------------------------------------------------------------
# Parameter init (conv weight [F, H], conv bias [1, H]; proj weight stored
# pre-transposed as [H_in, H_out], proj bias [1, H]).
# ----------------------------------------------------------------------------
def init_params(key, src_in, tgt_in, h):
    ks = jax.random.split(key, 8)

    def lin(ka, kb, fan_in, shape_w, shape_b):
        lim = 1.0 / jnp.sqrt(fan_in)
        return (jax.random.uniform(ka, shape_w, jnp.float32, -lim, lim),
                jax.random.uniform(kb, shape_b, jnp.float32, -lim, lim))

    src_w, src_b = lin(ks[0], ks[1], src_in, (src_in, h), (1, h))
    src_pw, src_pb = lin(ks[2], ks[3], h, (h, h), (1, h))
    tgt_w, tgt_b = lin(ks[4], ks[5], tgt_in, (tgt_in, h), (1, h))
    tgt_pw, tgt_pb = lin(ks[6], ks[7], h, (h, h), (1, h))
    return dict(src=(src_w, src_b, src_pw, src_pb),
                tgt=(tgt_w, tgt_b, tgt_pw, tgt_pb))


# ----------------------------------------------------------------------------
# Pure-JAX reference for correctness sanity check.
# ----------------------------------------------------------------------------
def _ref_tower(adj, feat, w, b, wp, bp):
    src_deg = jnp.maximum(adj.sum(0), 1.0)
    dst_deg = jnp.maximum(adj.sum(1), 1.0)
    f = feat * (src_deg ** -0.5)[:, None]
    if feat.shape[1] > w.shape[1]:
        h = adj @ (f @ w)
    else:
        h = (adj @ f) @ w
    h = h * (dst_deg ** -0.5)[:, None] + b
    return h @ wp + bp


def _ref_forward(params, nfs, adjs, nft, adjt, si, ti):
    sh = _ref_tower(adjs, nfs, *params["src"])[si]
    th = _ref_tower(adjt, nft, *params["tgt"])[ti]
    eps = 1e-12
    sh = sh / jnp.maximum(jnp.linalg.norm(sh, axis=1, keepdims=True), eps)
    th = th / jnp.maximum(jnp.linalg.norm(th, axis=2, keepdims=True), eps)
    return jnp.einsum("bh,bkh->bk", sh, th)


if __name__ == "__main__":
    key = jax.random.PRNGKey(0)
    k_par, k_fs, k_ft, k_as, k_at, k_si, k_ti = jax.random.split(key, 7)

    N_SRC, F_SRC = 64, 48     # src_in_feat_dim = 48
    N_TGT, F_TGT = 80, 16     # tgt_in_feat_dim = 16
    H = 32                    # h_feat_dim
    B, K = 8, 4               # queries, candidates per query

    params = init_params(k_par, F_SRC, F_TGT, H)
    packed = pack_params(params, F_SRC, F_TGT, H)

    node_feat_src = jax.random.normal(k_fs, (N_SRC, F_SRC), jnp.float32)
    node_feat_tgt = jax.random.normal(k_ft, (N_TGT, F_TGT), jnp.float32)
    adj_src = jax.random.bernoulli(k_as, 0.2, (N_SRC, N_SRC)).astype(jnp.float32)
    adj_tgt = jax.random.bernoulli(k_at, 0.2, (N_TGT, N_TGT)).astype(jnp.float32)
    src_index = jax.random.randint(k_si, (B,), 0, N_SRC)
    tgts_index = jax.random.randint(k_ti, (B, K), 0, N_TGT)

    logits = gdssm_forward(packed, node_feat_src, adj_src,
                           node_feat_tgt, adj_tgt, src_index, tgts_index)
    logits = jax.block_until_ready(logits)

    ref = _ref_forward(params, node_feat_src, adj_src, node_feat_tgt, adj_tgt,
                       src_index, tgts_index)
    assert logits.shape == (B, K)
    assert jnp.allclose(logits, ref, rtol=2e-3, atol=2e-3), "mismatch vs reference"

    print("KERNEL_OK")
</pallas_src>

<mosaic_0001>
module attributes {stable_mosaic.version = 11 : i64} {
  func.func @_gdssm_kernel(%arg0: memref<64x64xf32, #tpu.memory_space<vmem>>, %arg1: memref<64x48xf32, #tpu.memory_space<vmem>>, %arg2: memref<80x80xf32, #tpu.memory_space<vmem>>, %arg3: memref<80x16xf32, #tpu.memory_space<vmem>>, %arg4: memref<160x32xf32, #tpu.memory_space<vmem>>, %arg5: memref<32x2xi32, #tpu.memory_space<vmem>>, %arg6: memref<32x128xf32, #tpu.memory_space<vmem>>) attributes {dimension_semantics = [], scalar_prefetch = 0 : i64, scratch_operands = 0 : i64, tpu.core_type = #tpu.core_type<tc>} {
    %c0 = arith.constant 0 : index
    %c0_0 = arith.constant 0 : index
    %0 = vector.load %arg4[%c0, %c0_0] : memref<160x32xf32, #tpu.memory_space<vmem>>, vector<48x32xf32>
    %c48 = arith.constant 48 : index
    %c0_1 = arith.constant 0 : index
    %1 = vector.load %arg4[%c48, %c0_1] : memref<160x32xf32, #tpu.memory_space<vmem>>, vector<1x32xf32>
    %c56 = arith.constant 56 : index
    %c0_2 = arith.constant 0 : index
    %2 = vector.load %arg4[%c56, %c0_2] : memref<160x32xf32, #tpu.memory_space<vmem>>, vector<32x32xf32>
    %c88 = arith.constant 88 : index
    %c0_3 = arith.constant 0 : index
    %3 = vector.load %arg4[%c88, %c0_3] : memref<160x32xf32, #tpu.memory_space<vmem>>, vector<1x32xf32>
    %c96 = arith.constant 96 : index
    %c0_4 = arith.constant 0 : index
    %4 = vector.load %arg4[%c96, %c0_4] : memref<160x32xf32, #tpu.memory_space<vmem>>, vector<16x32xf32>
    %c112 = arith.constant 112 : index
    %c0_5 = arith.constant 0 : index
    %5 = vector.load %arg4[%c112, %c0_5] : memref<160x32xf32, #tpu.memory_space<vmem>>, vector<1x32xf32>
    %c120 = arith.constant 120 : index
    %c0_6 = arith.constant 0 : index
    %6 = vector.load %arg4[%c120, %c0_6] : memref<160x32xf32, #tpu.memory_space<vmem>>, vector<32x32xf32>
    %c152 = arith.constant 152 : index
    %c0_7 = arith.constant 0 : index
    %7 = vector.load %arg4[%c152, %c0_7] : memref<160x32xf32, #tpu.memory_space<vmem>>, vector<1x32xf32>
    %c0_8 = arith.constant 0 : index
    %c0_9 = arith.constant 0 : index
    %8 = vector.load %arg0[%c0_8, %c0_9] : memref<64x64xf32, #tpu.memory_space<vmem>>, vector<64x64xf32>
    %c0_10 = arith.constant 0 : index
    %c0_11 = arith.constant 0 : index
    %9 = vector.load %arg1[%c0_10, %c0_11] : memref<64x48xf32, #tpu.memory_space<vmem>>, vector<64x48xf32>
    %10 = arith.truncf %8 : vector<64x64xf32> to vector<64x64xbf16>
    %cst = arith.constant 1.000000e+00 : bf16
    %11 = vector.broadcast %cst : bf16 to vector<1x64xbf16>
    %cst_12 = arith.constant dense<0.000000e+00> : vector<1x64xf32>
    %12 = tpu.matmul %11, %10, %cst_12 {dimension_numbers = #tpu.dot_dimension_numbers<[1], [0], [0], [1], [0, 0, 1, 1], [], []>} : vector<1x64xbf16>, vector<64x64xbf16>, vector<1x64xf32> -> vector<1x64xf32>
    %cst_13 = arith.constant 1.000000e+00 : bf16
    %13 = vector.broadcast %cst_13 : bf16 to vector<64x1xbf16>
    %cst_14 = arith.constant dense<0.000000e+00> : vector<64x1xf32>
    %14 = tpu.matmul %10, %13, %cst_14 {dimension_numbers = #tpu.dot_dimension_numbers<[1], [0], [0], [1], [0, 0, 1, 1], [], []>} : vector<64x64xbf16>, vector<64x1xbf16>, vector<64x1xf32> -> vector<64x1xf32>
    %cst_15 = arith.constant 1.000000e+00 : f32
    %15 = vector.broadcast %cst_15 : f32 to vector<1x64xf32>
    %16 = arith.maximumf %12, %15 : vector<1x64xf32>
    %17 = math.rsqrt %16 : vector<1x64xf32>
    %cst_16 = arith.constant 1.000000e+00 : f32
    %18 = vector.broadcast %cst_16 : f32 to vector<64x1xf32>
    %19 = arith.maximumf %14, %18 : vector<64x1xf32>
    %20 = math.rsqrt %19 : vector<64x1xf32>
    %21 = vector.broadcast %17 : vector<1x64xf32> to vector<64x64xf32>
    %22 = arith.mulf %8, %21 : vector<64x64xf32>
    %cst_17 = arith.constant dense<0.000000e+00> : vector<64x32xf32>
    %23 = tpu.matmul %9, %0, %cst_17 {dimension_numbers = #tpu.dot_dimension_numbers<[1], [0], [0], [1], [0, 0, 1, 1], [], []>} : vector<64x48xf32>, vector<48x32xf32>, vector<64x32xf32> -> vector<64x32xf32>
    %cst_18 = arith.constant dense<0.000000e+00> : vector<64x32xf32>
    %24 = tpu.matmul %22, %23, %cst_18 {dimension_numbers = #tpu.dot_dimension_numbers<[1], [0], [0], [1], [0, 0, 1, 1], [], []>} : vector<64x64xf32>, vector<64x32xf32>, vector<64x32xf32> -> vector<64x32xf32>
    %25 = vector.broadcast %20 : vector<64x1xf32> to vector<64x32xf32>
    %26 = arith.mulf %24, %25 : vector<64x32xf32>
    %27 = vector.broadcast %1 : vector<1x32xf32> to vector<64x32xf32>
    %28 = arith.addf %26, %27 : vector<64x32xf32>
    %cst_19 = arith.constant dense<0.000000e+00> : vector<64x32xf32>
    %29 = tpu.matmul %28, %2, %cst_19 {dimension_numbers = #tpu.dot_dimension_numbers<[1], [0], [0], [1], [0, 0, 1, 1], [], []>} : vector<64x32xf32>, vector<32x32xf32>, vector<64x32xf32> -> vector<64x32xf32>
    %30 = vector.broadcast %3 : vector<1x32xf32> to vector<64x32xf32>
    %31 = arith.addf %29, %30 : vector<64x32xf32>
    %c0_20 = arith.constant 0 : index
    %c0_21 = arith.constant 0 : index
    %32 = vector.load %arg2[%c0_20, %c0_21] : memref<80x80xf32, #tpu.memory_space<vmem>>, vector<80x80xf32>
    %c0_22 = arith.constant 0 : index
    %c0_23 = arith.constant 0 : index
    %33 = vector.load %arg3[%c0_22, %c0_23] : memref<80x16xf32, #tpu.memory_space<vmem>>, vector<80x16xf32>
    %34 = arith.truncf %32 : vector<80x80xf32> to vector<80x80xbf16>
    %cst_24 = arith.constant 1.000000e+00 : bf16
    %35 = vector.broadcast %cst_24 : bf16 to vector<1x80xbf16>
    %cst_25 = arith.constant dense<0.000000e+00> : vector<1x80xf32>
    %36 = tpu.matmul %35, %34, %cst_25 {dimension_numbers = #tpu.dot_dimension_numbers<[1], [0], [0], [1], [0, 0, 1, 1], [], []>} : vector<1x80xbf16>, vector<80x80xbf16>, vector<1x80xf32> -> vector<1x80xf32>
    %cst_26 = arith.constant 1.000000e+00 : bf16
    %37 = vector.broadcast %cst_26 : bf16 to vector<80x1xbf16>
    %cst_27 = arith.constant dense<0.000000e+00> : vector<80x1xf32>
    %38 = tpu.matmul %34, %37, %cst_27 {dimension_numbers = #tpu.dot_dimension_numbers<[1], [0], [0], [1], [0, 0, 1, 1], [], []>} : vector<80x80xbf16>, vector<80x1xbf16>, vector<80x1xf32> -> vector<80x1xf32>
    %cst_28 = arith.constant 1.000000e+00 : f32
    %39 = vector.broadcast %cst_28 : f32 to vector<1x80xf32>
    %40 = arith.maximumf %36, %39 : vector<1x80xf32>
    %41 = math.rsqrt %40 : vector<1x80xf32>
    %cst_29 = arith.constant 1.000000e+00 : f32
    %42 = vector.broadcast %cst_29 : f32 to vector<80x1xf32>
    %43 = arith.maximumf %38, %42 : vector<80x1xf32>
    %44 = math.rsqrt %43 : vector<80x1xf32>
    %45 = vector.broadcast %41 : vector<1x80xf32> to vector<80x80xf32>
    %46 = arith.mulf %32, %45 : vector<80x80xf32>
    %cst_30 = arith.constant dense<0.000000e+00> : vector<80x16xf32>
    %47 = tpu.matmul %46, %33, %cst_30 {dimension_numbers = #tpu.dot_dimension_numbers<[1], [0], [0], [1], [0, 0, 1, 1], [], []>} : vector<80x80xf32>, vector<80x16xf32>, vector<80x16xf32> -> vector<80x16xf32>
    %cst_31 = arith.constant dense<0.000000e+00> : vector<80x32xf32>
    %48 = tpu.matmul %47, %4, %cst_31 {dimension_numbers = #tpu.dot_dimension_numbers<[1], [0], [0], [1], [0, 0, 1, 1], [], []>} : vector<80x16xf32>, vector<16x32xf32>, vector<80x32xf32> -> vector<80x32xf32>
    %49 = vector.broadcast %44 : vector<80x1xf32> to vector<80x32xf32>
    %50 = arith.mulf %48, %49 : vector<80x32xf32>
    %51 = vector.broadcast %5 : vector<1x32xf32> to vector<80x32xf32>
    %52 = arith.addf %50, %51 : vector<80x32xf32>
    %cst_32 = arith.constant dense<0.000000e+00> : vector<80x32xf32>
    %53 = tpu.matmul %52, %6, %cst_32 {dimension_numbers = #tpu.dot_dimension_numbers<[1], [0], [0], [1], [0, 0, 1, 1], [], []>} : vector<80x32xf32>, vector<32x32xf32>, vector<80x32xf32> -> vector<80x32xf32>
    %54 = vector.broadcast %7 : vector<1x32xf32> to vector<80x32xf32>
    %55 = arith.addf %53, %54 : vector<80x32xf32>
    %c0_33 = arith.constant 0 : index
    %c0_34 = arith.constant 0 : index
    %56 = vector.load %arg5[%c0_33, %c0_34] : memref<32x2xi32, #tpu.memory_space<vmem>>, vector<32x2xi32>
    %57 = tpu.iota {dimensions = array<i32: 1>} : vector<32x64xi32>
    %58 = vector.extract_strided_slice %56 {offsets = [0, 0], sizes = [32, 1], strides = [1, 1]} : vector<32x2xi32> to vector<32x1xi32>
    %59 = vector.broadcast %58 : vector<32x1xi32> to vector<32x64xi32>
    %60 = arith.cmpi eq, %57, %59 : vector<32x64xi32>
    %61 = arith.extui %60 : vector<32x64xi1> to vector<32x64xi32>
    %62 = arith.sitofp %61 : vector<32x64xi32> to vector<32x64xf32>
    %63 = tpu.iota {dimensions = array<i32: 1>} : vector<32x80xi32>
    %64 = vector.extract_strided_slice %56 {offsets = [0, 1], sizes = [32, 1], strides = [1, 1]} : vector<32x2xi32> to vector<32x1xi32>
    %65 = vector.broadcast %64 : vector<32x1xi32> to vector<32x80xi32>
    %66 = arith.cmpi eq, %63, %65 : vector<32x80xi32>
    %67 = arith.extui %66 : vector<32x80xi1> to vector<32x80xi32>
    %68 = arith.sitofp %67 : vector<32x80xi32> to vector<32x80xf32>
    %cst_35 = arith.constant dense<0.000000e+00> : vector<32x32xf32>
    %69 = tpu.matmul %62, %31, %cst_35 {dimension_numbers = #tpu.dot_dimension_numbers<[1], [0], [0], [1], [0, 0, 1, 1], [], []>} : vector<32x64xf32>, vector<64x32xf32>, vector<32x32xf32> -> vector<32x32xf32>
    %cst_36 = arith.constant dense<0.000000e+00> : vector<32x32xf32>
    %70 = tpu.matmul %68, %55, %cst_36 {dimension_numbers = #tpu.dot_dimension_numbers<[1], [0], [0], [1], [0, 0, 1, 1], [], []>} : vector<32x80xf32>, vector<80x32xf32>, vector<32x32xf32> -> vector<32x32xf32>
    %71 = arith.mulf %69, %69 : vector<32x32xf32>
    %cst_37 = arith.constant dense<0.000000e+00> : vector<32xf32>
    %72 = vector.multi_reduction <add>, %71, %cst_37 [1] : vector<32x32xf32> to vector<32xf32>
    %73 = vector.shape_cast %72 : vector<32xf32> to vector<32x1xf32>
    %cst_38 = arith.constant 1.000000e-24 : f32
    %74 = vector.broadcast %cst_38 : f32 to vector<32x1xf32>
    %75 = arith.maximumf %73, %74 : vector<32x1xf32>
    %76 = math.rsqrt %75 : vector<32x1xf32>
    %77 = vector.broadcast %76 : vector<32x1xf32> to vector<32x32xf32>
    %78 = arith.mulf %69, %77 : vector<32x32xf32>
    %79 = arith.mulf %70, %70 : vector<32x32xf32>
    %cst_39 = arith.constant dense<0.000000e+00> : vector<32xf32>
    %80 = vector.multi_reduction <add>, %79, %cst_39 [1] : vector<32x32xf32> to vector<32xf32>
    %81 = vector.shape_cast %80 : vector<32xf32> to vector<32x1xf32>
    %cst_40 = arith.constant 1.000000e-24 : f32
    %82 = vector.broadcast %cst_40 : f32 to vector<32x1xf32>
    %83 = arith.maximumf %81, %82 : vector<32x1xf32>
    %84 = math.rsqrt %83 : vector<32x1xf32>
    %85 = vector.broadcast %84 : vector<32x1xf32> to vector<32x32xf32>
    %86 = arith.mulf %70, %85 : vector<32x32xf32>
    %87 = arith.mulf %78, %86 : vector<32x32xf32>
    %cst_41 = arith.constant 1.000000e+00 : f32
    %88 = vector.broadcast %cst_41 : f32 to vector<32x128xf32>
    %cst_42 = arith.constant dense<0.000000e+00> : vector<32x128xf32>
    %89 = tpu.matmul %87, %88, %cst_42 {dimension_numbers = #tpu.dot_dimension_numbers<[1], [0], [0], [1], [0, 0, 1, 1], [], []>} : vector<32x32xf32>, vector<32x128xf32>, vector<32x128xf32> -> vector<32x128xf32>
    %c0_43 = arith.constant 0 : index
    %c0_44 = arith.constant 0 : index
    %90 = vector.load %arg6[%c0_43, %c0_44] : memref<32x128xf32, #tpu.memory_space<vmem>>, vector<32x128xf32>
    tpu.vector_store %arg6[%c0_43, %c0_44], %89 {strides = array<i32>} : memref<32x128xf32, #tpu.memory_space<vmem>>, vector<32x128xf32>,
    return
  }
}

</mosaic_0001>

<llo_original>
// kernel: tpu_custom_call.1
$region0: #{tpu_custom_call.1}
  #allocation0 [shape = 'u32[]', space=smem, size = 0x4, offset = 0x4, fixed_abs, tag = 'smem constant byte address 0x4 - core index']
  #allocation1 [shape = 'u32[144,128]{1,0:T(1,128)}', space=vmem, size = 0x12000, scoped, tag = 'internal scratch']
  %s0 = inlined_call_operand.vmem [shape: f32[64,64], index: 0, kind: input, shape index: {}]
  %s1 = inlined_call_operand.vmem [shape: f32[64,48], index: 1, kind: input, shape index: {}]
  %s2 = inlined_call_operand.vmem [shape: f32[80,80], index: 2, kind: input, shape index: {}]
  %s3 = inlined_call_operand.vmem [shape: f32[80,16], index: 3, kind: input, shape index: {}]
  %s4 = inlined_call_operand.vmem [shape: f32[160,32], index: 4, kind: input, shape index: {}]
  %s5 = inlined_call_operand.vmem [shape: s32[32,2], index: 5, kind: input, shape index: {}]
  %s6 = inlined_call_operand.hbm [shape: f32[32,128], index: 6, kind: output, shape index: {}]
  %s7 = sld [smem:[#allocation0]]
  $region34: #{tpu_custom_call.1} parent=0
    _
  %s9 = ssub.s32 1, %s7
  %s10 = scalar_select 0, %s9, %s7
  $region1: #{tpu_custom_call.1} parent=0
    #allocation2 [shape = 'u8[16384]{0}', space=vmem, size = 0x4000, scoped, tag = 'output window, operand 0, single buffered']
    #allocation3 [shape = 's32[1]{0}', space=sflag, size = 0x4, scoped, tag = 'scoped memory for tpu_custom_call.1']
    %11 = vsyncpa [#allocation3], 0
    // Predicated region
    $region2: #{tpu_custom_call.1} parent=1 // pred_check
      _
    $region3: #{tpu_custom_call.1} parent=1 // pred_check_branch
      %13 = sbr.rel (0) target = $region5
    $region4: #{tpu_custom_call.1} parent=1 // pred_region
      _
    $region5: #{tpu_custom_call.1} parent=1 // pred_fallthru
      _
    // Predicated region
    $region6: #{tpu_custom_call.1} parent=1 // pred_check
      _
    $region7: #{tpu_custom_call.1} parent=1 // pred_check_branch
      %15 = sbr.rel (0) target = $region9
    $region8: #{tpu_custom_call.1} parent=1 // pred_region
      _
    $region9: #{tpu_custom_call.1} parent=1 // pred_fallthru
      _
    // Predicated region
    $region10: #{tpu_custom_call.1} parent=1 // pred_check
      _
    $region11: #{tpu_custom_call.1} parent=1 // pred_check_branch
      %17 = sbr.rel (0) target = $region13
    $region12: #{tpu_custom_call.1} parent=1 // pred_region
      _
    $region13: #{tpu_custom_call.1} parent=1 // pred_fallthru
      _
    // Predicated region
    $region14: #{tpu_custom_call.1} parent=1 // pred_check
      _
    $region15: #{tpu_custom_call.1} parent=1 // pred_check_branch
      %19 = sbr.rel (0) target = $region17
    $region16: #{tpu_custom_call.1} parent=1 // pred_region
      _
    $region17: #{tpu_custom_call.1} parent=1 // pred_fallthru
      _
    // Predicated region
    $region18: #{tpu_custom_call.1} parent=1 // pred_check
      _
    $region19: #{tpu_custom_call.1} parent=1 // pred_check_branch
      %21 = sbr.rel (0) target = $region21
    $region20: #{tpu_custom_call.1} parent=1 // pred_region
      _
    $region21: #{tpu_custom_call.1} parent=1 // pred_fallthru
      _
    // Predicated region
    $region22: #{tpu_custom_call.1} parent=1 // pred_check
      _
    $region23: #{tpu_custom_call.1} parent=1 // pred_check_branch
      %23 = sbr.rel (0) target = $region25
    $region24: #{tpu_custom_call.1} parent=1 // pred_region
      _
    $region25: #{tpu_custom_call.1} parent=1 // pred_fallthru
      _
    %v26 = vld [vmem:[%s4] sm:$0xff]
    %v27 = vld [vmem:[%s4 + $0x8] sm:$0xff]
    %v28 = vld [vmem:[%s4 + $0x10] sm:$0xff]
    %v29 = vld [vmem:[%s4 + $0x18] sm:$0xff]
    %v30 = vld [vmem:[%s4 + $0x20] sm:$0xff]
    %v31 = vld [vmem:[%s4 + $0x28] sm:$0xff]
    %v32 = vld [vmem:[%s4 + $0x30] sm:$0x1]
    %v33 = vld [vmem:[%s4 + $0x38] sm:$0xff]
    %v34 = vld [vmem:[%s4 + $0x40] sm:$0xff]
    %v35 = vld [vmem:[%s4 + $0x48] sm:$0xff]
    %v36 = vld [vmem:[%s4 + $0x50] sm:$0xff]
    %v37 = vld [vmem:[%s4 + $0x58] sm:$0x1]
    %v38 = vld [vmem:[%s4 + $0x60] sm:$0xff]
    %v39 = vld [vmem:[%s4 + $0x68] sm:$0xff]
    %v40 = vld [vmem:[%s4 + $0x70] sm:$0x1]
    %v41 = vld [vmem:[%s4 + $0x78] sm:$0xff]
    %v42 = vld [vmem:[%s4 + $0x80] sm:$0xff]
    %v43 = vld [vmem:[%s4 + $0x88] sm:$0xff]
    %v44 = vld [vmem:[%s4 + $0x90] sm:$0xff]
    %v45 = vld [vmem:[%s4 + $0x98] sm:$0x1]
    %v46 = vld [vmem:[%s0] sm:$0xff]
    %v47 = vld [vmem:[%s0 + $0x8] sm:$0xff]
    %v48 = vld [vmem:[%s0 + $0x10] sm:$0xff]
    %v49 = vld [vmem:[%s0 + $0x18] sm:$0xff]
    %v50 = vld [vmem:[%s0 + $0x20] sm:$0xff]
    %v51 = vld [vmem:[%s0 + $0x28] sm:$0xff]
    %v52 = vld [vmem:[%s0 + $0x30] sm:$0xff]
    %v53 = vld [vmem:[%s0 + $0x38] sm:$0xff]
    %v54 = vld [vmem:[%s1] sm:$0xff]
    %v55 = vld [vmem:[%s1 + $0x8] sm:$0xff]
    %v56 = vld [vmem:[%s1 + $0x10] sm:$0xff]
    %v57 = vld [vmem:[%s1 + $0x18] sm:$0xff]
    %v58 = vld [vmem:[%s1 + $0x20] sm:$0xff]
    %v59 = vld [vmem:[%s1 + $0x28] sm:$0xff]
    %v60 = vld [vmem:[%s1 + $0x30] sm:$0xff]
    %v61 = vld [vmem:[%s1 + $0x38] sm:$0xff]
    %v62 = vpack.c.bf16 %v47, %v46
    %v63 = vpack.c.bf16 %v49, %v48
    %v64 = vpack.c.bf16 %v51, %v50
    %v65 = vpack.c.bf16 %v53, %v52
    %vm66 = vcmask 523264
    %v68 = vsel %vm66, 1065369472, 0
    %70 = vmatprep.subr.bf16.mxu0 0
    %71 = vmatpush1.bf16.msra.mxu0 0
    %72 = vmatprep.subr.bf16.mxu0 0
    %73 = vmatpush1.bf16.msra.mxu0 0
    %74 = vmatprep.subr.bf16.mxu0 0
    %75 = vmatpush1.bf16.msra.mxu0 0
    %76 = vmatprep.subr.bf16.mxu0 0
    %77 = vmatpush1.bf16.msra.mxu0 0
    %78 = vmatprep.subr.bf16.mxu0 0
    %79 = vmatpush1.bf16.msra.mxu0 %v65
    %80 = vmatprep.subr.bf16.mxu0 0
    %81 = vmatpush1.bf16.msra.mxu0 %v64
    %82 = vmatprep.subr.bf16.mxu0 0
    %83 = vmatpush1.bf16.msra.mxu0 %v63
    %84 = vmatprep.subr.bf16.mxu0 0
    %85 = vmatpush1.bf16.msra.mxu0 %v62
    %86 = vmatprep.subr.bf16.mxu0 0
    %87 = vmatpush2.bf16.msra.mxu0 0
    %88 = vmatprep.subr.bf16.mxu0 0
    %89 = vmatpush2.bf16.msra.mxu0 0
    %90 = vmatprep.subr.bf16.mxu0 0
    %91 = vmatpush2.bf16.msra.mxu0 0
    %92 = vmatprep.subr.bf16.mxu0 0
    %93 = vmatpush2.bf16.msra.mxu0 0
    %94 = vmatprep.subr.bf16.mxu0 0
    %95 = vmatpush2.bf16.msra.mxu0 0
    %96 = vmatprep.subr.bf16.mxu0 0
    %97 = vmatpush2.bf16.msra.mxu0 0
    %98 = vmatprep.subr.bf16.mxu0 0
    %99 = vmatpush2.bf16.msra.mxu0 0
    %100 = vmatprep.subr.bf16.mxu0 0
    %101 = vmatpush2.bf16.msra.mxu0 0
    %102 = vmatprep.mubr.bf16.mxu0 0
    %103 = vmatmul.mubr.bf16.gmra.mxu0 %v68
    %v104 = vpop.f32.mrf.mxu0
    %v105 = vadd.f32 0.0, %v104
    %v106 = vpop.f32.mrf.mxu0
    %v107 = vpop.f32.mrf.mxu0
    %v108 = vpop.f32.mrf.mxu0
    %109 = vdwg.mxu0
    %v111 = vsel %vm66, %v62, 0
    %v114 = vsel %vm66, %v63, 0
    %v117 = vsel %vm66, %v64, 0
    %v120 = vsel %vm66, %v65, 0
    %122 = vmatprep.subr.bf16.mxu0 0
    %123 = vmatpush1.bf16.msra.mxu0 0
    %124 = vmatprep.subr.bf16.mxu0 0
    %125 = vmatpush1.bf16.msra.mxu0 0
    %126 = vmatprep.subr.bf16.mxu0 0
    %127 = vmatpush1.bf16.msra.mxu0 0
    %128 = vmatprep.subr.bf16.mxu0 0
    %129 = vmatpush1.bf16.msra.mxu0 0
    %130 = vmatprep.subr.bf16.mxu0 0
    %131 = vmatpush1.bf16.msra.mxu0 1065369472
    %132 = vmatprep.subr.bf16.mxu0 0
    %133 = vmatpush1.bf16.msra.mxu0 1065369472
    %134 = vmatprep.subr.bf16.mxu0 0
    %135 = vmatpush1.bf16.msra.mxu0 1065369472
    %136 = vmatprep.subr.bf16.mxu0 0
    %137 = vmatpush1.bf16.msra.mxu0 1065369472
    %138 = vmatprep.subr.bf16.mxu0 0
    %139 = vmatpush2.bf16.msra.mxu0 0
    %140 = vmatprep.subr.bf16.mxu0 0
    %141 = vmatpush2.bf16.msra.mxu0 0
    %142 = vmatprep.subr.bf16.mxu0 0
    %143 = vmatpush2.bf16.msra.mxu0 0
    %144 = vmatprep.subr.bf16.mxu0 0
    %145 = vmatpush2.bf16.msra.mxu0 0
    %146 = vmatprep.subr.bf16.mxu0 0
    %147 = vmatpush2.bf16.msra.mxu0 0
    %148 = vmatprep.subr.bf16.mxu0 0
    %149 = vmatpush2.bf16.msra.mxu0 0
    %150 = vmatprep.subr.bf16.mxu0 0
    %151 = vmatpush2.bf16.msra.mxu0 0
    %152 = vmatprep.subr.bf16.mxu0 0
    %153 = vmatpush2.bf16.msra.mxu0 0
    %154 = vmatprep.mubr.bf16.mxu0 0
    %155 = vmatmul.mubr.bf16.gmra.mxu0 %v111
    %v156 = vpop.f32.mrf.mxu0
    %v157 = vadd.f32 0.0, %v156
    %v158 = vpop.f32.mrf.mxu0
    %v159 = vpop.f32.mrf.mxu0
    %v160 = vadd.f32 0.0, %v159
    %v161 = vpop.f32.mrf.mxu0
    %162 = vmatprep.mubr.bf16.mxu0 0
    %163 = vmatmul.mubr.bf16.gmra.mxu0 %v114
    %v164 = vpop.f32.mrf.mxu0
    %v165 = vadd.f32 0.0, %v164
    %v166 = vpop.f32.mrf.mxu0
    %v167 = vpop.f32.mrf.mxu0
    %v168 = vadd.f32 0.0, %v167
    %v169 = vpop.f32.mrf.mxu0
    %170 = vmatprep.mubr.bf16.mxu0 0
    %171 = vmatmul.mubr.bf16.gmra.mxu0 %v117
    %v172 = vpop.f32.mrf.mxu0
    %v173 = vadd.f32 0.0, %v172
    %v174 = vpop.f32.mrf.mxu0
    %v175 = vpop.f32.mrf.mxu0
    %v176 = vadd.f32 0.0, %v175
    %v177 = vpop.f32.mrf.mxu0
    %178 = vmatprep.mubr.bf16.mxu0 0
    %179 = vmatmul.mubr.bf16.gmra.mxu0 %v120
    %v180 = vpop.f32.mrf.mxu0
    %v181 = vadd.f32 0.0, %v180
    %v182 = vpop.f32.mrf.mxu0
    %v183 = vpop.f32.mrf.mxu0
    %v184 = vadd.f32 0.0, %v183
    %v185 = vpop.f32.mrf.mxu0
    %186 = vdwg.mxu0
    %v187 = vmax.f32 %v105, 1.0
    %v188 = vrsqrt.pop %v187
    %v189 = vmax.f32 %v157, 1.0
    %v190 = vmax.f32 %v160, 1.0
    %v191 = vmax.f32 %v165, 1.0
    %v192 = vmax.f32 %v168, 1.0
    %v193 = vmax.f32 %v173, 1.0
    %v194 = vmax.f32 %v176, 1.0
    %v195 = vmax.f32 %v181, 1.0
    %v196 = vmax.f32 %v184, 1.0
    %v197 = vrsqrt.pop %v189
    %v198 = vrsqrt.pop %v190
    %v199 = vrsqrt.pop %v191
    %v200 = vrsqrt.pop %v192
    %v201 = vrsqrt.pop %v193
    %v202 = vrsqrt.pop %v194
    %v203 = vrsqrt.pop %v195
    %v204 = vrsqrt.pop %v196
    %v205 = vlaneseq
    %v206 = vshrl.u32 %v205, 7
    %v207 = vsub.s32 0, %v206
    %v208 = vrot.slane %v188, %v207
    %v209 = vmul.f32 %v46, %v208
    %v210 = vmul.f32 %v47, %v208
    %v211 = vmul.f32 %v48, %v208
    %v212 = vmul.f32 %v49, %v208
    %v213 = vmul.f32 %v50, %v208
    %v214 = vmul.f32 %v51, %v208
    %v215 = vmul.f32 %v52, %v208
    %v216 = vmul.f32 %v53, %v208
    %vm217 = vcmask 392192
    %v219 = vsel %vm217, %v54, 0
    %v222 = vsel %vm217, %v55, 0
    %v225 = vsel %vm217, %v56, 0
    %v228 = vsel %vm217, %v57, 0
    %v231 = vsel %vm217, %v58, 0
    %v234 = vsel %vm217, %v59, 0
    %v237 = vsel %vm217, %v60, 0
    %v240 = vsel %vm217, %v61, 0
    %242 = vmatprep.subr.mxu0 0.0
    %243 = vmatpush1.msra.mxu0 0.0
    %244 = vmatprep.subr.mxu0 0.0
    %245 = vmatpush1.msra.mxu0 0.0
    %246 = vmatprep.subr.mxu0 0.0
    %247 = vmatpush1.msra.mxu0 0.0
    %248 = vmatprep.subr.mxu0 0.0
    %249 = vmatpush1.msra.mxu0 0.0
    %250 = vmatprep.subr.mxu0 0.0
    %251 = vmatpush1.msra.mxu0 0.0
    %252 = vmatprep.subr.mxu0 0.0
    %253 = vmatpush1.msra.mxu0 0.0
    %254 = vmatprep.subr.mxu0 0.0
    %255 = vmatpush1.msra.mxu0 0.0
    %256 = vmatprep.subr.mxu0 0.0
    %257 = vmatpush1.msra.mxu0 0.0
    %258 = vmatprep.subr.mxu0 0.0
    %259 = vmatpush1.msra.mxu0 0.0
    %260 = vmatprep.subr.mxu0 0.0
    %261 = vmatpush1.msra.mxu0 0.0
    %262 = vmatprep.subr.mxu0 0.0
    %263 = vmatpush1.msra.mxu0 %v31
    %264 = vmatprep.subr.mxu0 0.0
    %265 = vmatpush1.msra.mxu0 %v30
    %266 = vmatprep.subr.mxu0 0.0
    %267 = vmatpush1.msra.mxu0 %v29
    %268 = vmatprep.subr.mxu0 0.0
    %269 = vmatpush1.msra.mxu0 %v28
    %270 = vmatprep.subr.mxu0 0.0
    %271 = vmatpush1.msra.mxu0 %v27
    %272 = vmatprep.subr.mxu0 0.0
    %273 = vmatpush1.msra.mxu0 %v26
    %274 = vmatprep.subr.mxu0 0.0
    %275 = vmatpush2.msra.mxu0 0.0
    %276 = vmatprep.subr.mxu0 0.0
    %277 = vmatpush2.msra.mxu0 0.0
    %278 = vmatprep.subr.mxu0 0.0
    %279 = vmatpush2.msra.mxu0 0.0
    %280 = vmatprep.subr.mxu0 0.0
    %281 = vmatpush2.msra.mxu0 0.0
    %282 = vmatprep.subr.mxu0 0.0
    %283 = vmatpush2.msra.mxu0 0.0
    %284 = vmatprep.subr.mxu0 0.0
    %285 = vmatpush2.msra.mxu0 0.0
    %286 = vmatprep.subr.mxu0 0.0
    %287 = vmatpush2.msra.mxu0 0.0
    %288 = vmatprep.subr.mxu0 0.0
    %289 = vmatpush2.msra.mxu0 0.0
    %290 = vmatprep.subr.mxu0 0.0
    %291 = vmatpush2.msra.mxu0 0.0
    %292 = vmatprep.subr.mxu0 0.0
    %293 = vmatpush2.msra.mxu0 0.0
    %294 = vmatprep.subr.mxu0 0.0
    %295 = vmatpush2.msra.mxu0 0.0
    %296 = vmatprep.subr.mxu0 0.0
    %297 = vmatpush2.msra.mxu0 0.0
    %298 = vmatprep.subr.mxu0 0.0
    %299 = vmatpush2.msra.mxu0 0.0
    %300 = vmatprep.subr.mxu0 0.0
    %301 = vmatpush2.msra.mxu0 0.0
    %302 = vmatprep.subr.mxu0 0.0
    %303 = vmatpush2.msra.mxu0 0.0
    %304 = vmatprep.subr.mxu0 0.0
    %305 = vmatpush2.msra.mxu0 0.0
    %306 = vmatprep.mubr.f32.mxu0 0.0
    %307 = vmatmul.mubr.f32.gmra.mxu0 %v219
    %v308 = vpop.f32.mrf.mxu0
    %v309 = vadd.f32 0.0, %v308
    %v310 = vpop.f32.mrf.mxu0
    %311 = vmatprep.mubr.f32.mxu0 0.0
    %312 = vmatmul.mubr.f32.gmra.mxu0 %v222
    %v313 = vpop.f32.mrf.mxu0
    %v314 = vadd.f32 0.0, %v313
    %v315 = vpop.f32.mrf.mxu0
    %316 = vmatprep.mubr.f32.mxu0 0.0
    %317 = vmatmul.mubr.f32.gmra.mxu0 %v225
    %v318 = vpop.f32.mrf.mxu0
    %v319 = vadd.f32 0.0, %v318
    %v320 = vpop.f32.mrf.mxu0
    %321 = vmatprep.mubr.f32.mxu0 0.0
    %322 = vmatmul.mubr.f32.gmra.mxu0 %v228
    %v323 = vpop.f32.mrf.mxu0
    %v324 = vadd.f32 0.0, %v323
    %v325 = vpop.f32.mrf.mxu0
    %326 = vmatprep.mubr.f32.mxu0 0.0
    %327 = vmatmul.mubr.f32.gmra.mxu0 %v231
    %v328 = vpop.f32.mrf.mxu0
    %v329 = vadd.f32 0.0, %v328
    %v330 = vpop.f32.mrf.mxu0
    %331 = vmatprep.mubr.f32.mxu0 0.0
    %332 = vmatmul.mubr.f32.gmra.mxu0 %v234
    %v333 = vpop.f32.mrf.mxu0
    %v334 = vadd.f32 0.0, %v333
    %v335 = vpop.f32.mrf.mxu0
    %336 = vmatprep.mubr.f32.mxu0 0.0
    %337 = vmatmul.mubr.f32.gmra.mxu0 %v237
    %v338 = vpop.f32.mrf.mxu0
    %v339 = vadd.f32 0.0, %v338
    %v340 = vpop.f32.mrf.mxu0
    %341 = vmatprep.mubr.f32.mxu0 0.0
    %342 = vmatmul.mubr.f32.gmra.mxu0 %v240
    %v343 = vpop.f32.mrf.mxu0
    %v344 = vadd.f32 0.0, %v343
    %v345 = vpop.f32.mrf.mxu0
    %346 = vdwg.mxu0
    %v348 = vsel %vm66, %v209, 0
    %v351 = vsel %vm66, %v210, 0
    %v354 = vsel %vm66, %v211, 0
    %v357 = vsel %vm66, %v212, 0
    %v360 = vsel %vm66, %v213, 0
    %v363 = vsel %vm66, %v214, 0
    %v366 = vsel %vm66, %v215, 0
    %v369 = vsel %vm66, %v216, 0
    %371 = vmatprep.subr.mxu0 0.0
    %372 = vmatpush1.msra.mxu0 0.0
    %373 = vmatprep.subr.mxu0 0.0
    %374 = vmatpush1.msra.mxu0 0.0
    %375 = vmatprep.subr.mxu0 0.0
    %376 = vmatpush1.msra.mxu0 0.0
    %377 = vmatprep.subr.mxu0 0.0
    %378 = vmatpush1.msra.mxu0 0.0
    %379 = vmatprep.subr.mxu0 0.0
    %380 = vmatpush1.msra.mxu0 0.0
    %381 = vmatprep.subr.mxu0 0.0
    %382 = vmatpush1.msra.mxu0 0.0
    %383 = vmatprep.subr.mxu0 0.0
    %384 = vmatpush1.msra.mxu0 0.0
    %385 = vmatprep.subr.mxu0 0.0
    %386 = vmatpush1.msra.mxu0 0.0
    %387 = vmatprep.subr.mxu0 0.0
    %388 = vmatpush1.msra.mxu0 %v344
    %389 = vmatprep.subr.mxu0 0.0
    %390 = vmatpush1.msra.mxu0 %v339
    %391 = vmatprep.subr.mxu0 0.0
    %392 = vmatpush1.msra.mxu0 %v334
    %393 = vmatprep.subr.mxu0 0.0
    %394 = vmatpush1.msra.mxu0 %v329
    %395 = vmatprep.subr.mxu0 0.0
    %396 = vmatpush1.msra.mxu0 %v324
    %397 = vmatprep.subr.mxu0 0.0
    %398 = vmatpush1.msra.mxu0 %v319
    %399 = vmatprep.subr.mxu0 0.0
    %400 = vmatpush1.msra.mxu0 %v314
    %401 = vmatprep.subr.mxu0 0.0
    %402 = vmatpush1.msra.mxu0 %v309
    %403 = vmatprep.subr.mxu0 0.0
    %404 = vmatpush2.msra.mxu0 0.0
    %405 = vmatprep.subr.mxu0 0.0
    %406 = vmatpush2.msra.mxu0 0.0
    %407 = vmatprep.subr.mxu0 0.0
    %408 = vmatpush2.msra.mxu0 0.0
    %409 = vmatprep.subr.mxu0 0.0
    %410 = vmatpush2.msra.mxu0 0.0
    %411 = vmatprep.subr.mxu0 0.0
    %412 = vmatpush2.msra.mxu0 0.0
    %413 = vmatprep.subr.mxu0 0.0
    %414 = vmatpush2.msra.mxu0 0.0
    %415 = vmatprep.subr.mxu0 0.0
    %416 = vmatpush2.msra.mxu0 0.0
    %417 = vmatprep.subr.mxu0 0.0
    %418 = vmatpush2.msra.mxu0 0.0
    %419 = vmatprep.subr.mxu0 0.0
    %420 = vmatpush2.msra.mxu0 0.0
    %421 = vmatprep.subr.mxu0 0.0
    %422 = vmatpush2.msra.mxu0 0.0
    %423 = vmatprep.subr.mxu0 0.0
    %424 = vmatpush2.msra.mxu0 0.0
    %425 = vmatprep.subr.mxu0 0.0
    %426 = vmatpush2.msra.mxu0 0.0
    %427 = vmatprep.subr.mxu0 0.0
    %428 = vmatpush2.msra.mxu0 0.0
    %429 = vmatprep.subr.mxu0 0.0
    %430 = vmatpush2.msra.mxu0 0.0
    %431 = vmatprep.subr.mxu0 0.0
    %432 = vmatpush2.msra.mxu0 0.0
    %433 = vmatprep.subr.mxu0 0.0
    %434 = vmatpush2.msra.mxu0 0.0
    %435 = vmatprep.mubr.f32.mxu0 0.0
    %436 = vmatmul.mubr.f32.gmra.mxu0 %v348
    %v437 = vpop.f32.mrf.mxu0
    %v438 = vadd.f32 0.0, %v437
    %v439 = vpop.f32.mrf.mxu0
    %440 = vmatprep.mubr.f32.mxu0 0.0
    %441 = vmatmul.mubr.f32.gmra.mxu0 %v351
    %v442 = vpop.f32.mrf.mxu0
    %v443 = vadd.f32 0.0, %v442
    %v444 = vpop.f32.mrf.mxu0
    %445 = vmatprep.mubr.f32.mxu0 0.0
    %446 = vmatmul.mubr.f32.gmra.mxu0 %v354
    %v447 = vpop.f32.mrf.mxu0
    %v448 = vadd.f32 0.0, %v447
    %v449 = vpop.f32.mrf.mxu0
    %450 = vmatprep.mubr.f32.mxu0 0.0
    %451 = vmatmul.mubr.f32.gmra.mxu0 %v357
    %v452 = vpop.f32.mrf.mxu0
    %v453 = vadd.f32 0.0, %v452
    %v454 = vpop.f32.mrf.mxu0
    %455 = vmatprep.mubr.f32.mxu0 0.0
    %456 = vmatmul.mubr.f32.gmra.mxu0 %v360
    %v457 = vpop.f32.mrf.mxu0
    %v458 = vadd.f32 0.0, %v457
    %v459 = vpop.f32.mrf.mxu0
    %460 = vmatprep.mubr.f32.mxu0 0.0
    %461 = vmatmul.mubr.f32.gmra.mxu0 %v363
    %v462 = vpop.f32.mrf.mxu0
    %v463 = vadd.f32 0.0, %v462
    %v464 = vpop.f32.mrf.mxu0
    %465 = vmatprep.mubr.f32.mxu0 0.0
    %466 = vmatmul.mubr.f32.gmra.mxu0 %v366
    %v467 = vpop.f32.mrf.mxu0
    %v468 = vadd.f32 0.0, %v467
    %v469 = vpop.f32.mrf.mxu0
    %470 = vmatprep.mubr.f32.mxu0 0.0
    %471 = vmatmul.mubr.f32.gmra.mxu0 %v369
    %v472 = vpop.f32.mrf.mxu0
    %v473 = vadd.f32 0.0, %v472
    %v474 = vpop.f32.mrf.mxu0
    %475 = vdwg.mxu0
    %477 = vset.pattern.permute.xlu0 0
    %478 = vperm.xlu0 %477, %v197
    %v479 = vpop.permute.xlu0 %478
    %482 = vset.pattern.permute.xlu0 0
    %483 = vperm.xlu0 %482, %v198
    %v484 = vpop.permute.xlu0 %483
    %487 = vset.pattern.permute.xlu0 0
    %488 = vperm.xlu0 %487, %v199
    %v489 = vpop.permute.xlu0 %488
    %492 = vset.pattern.permute.xlu0 0
    %493 = vperm.xlu0 %492, %v200
    %v494 = vpop.permute.xlu0 %493
    %497 = vset.pattern.permute.xlu0 0
    %498 = vperm.xlu0 %497, %v201
    %v499 = vpop.permute.xlu0 %498
    %502 = vset.pattern.permute.xlu0 0
    %503 = vperm.xlu0 %502, %v202
    %v504 = vpop.permute.xlu0 %503
    %507 = vset.pattern.permute.xlu0 0
    %508 = vperm.xlu0 %507, %v203
    %v509 = vpop.permute.xlu0 %508
    %512 = vset.pattern.permute.xlu0 0
    %513 = vperm.xlu0 %512, %v204
    %v514 = vpop.permute.xlu0 %513
    %v516 = vmul.f32 %v438, %v479
    %v517 = vmul.f32 %v443, %v484
    %v518 = vmul.f32 %v448, %v489
    %v519 = vmul.f32 %v453, %v494
    %v520 = vmul.f32 %v458, %v499
    %v521 = vmul.f32 %v463, %v504
    %v522 = vmul.f32 %v468, %v509
    %v523 = vmul.f32 %v473, %v514
    %v524 = vlaneseq
    %v525 = vshrl.u32 %v524, 7
    %v526 = vsub.s32 0, %v525
    %v527 = vrot.slane %v32, %v526
    %v528 = vadd.f32 %v516, %v527
    %v529 = vadd.f32 %v517, %v527
    %v530 = vadd.f32 %v518, %v527
    %v531 = vadd.f32 %v519, %v527
    %v532 = vadd.f32 %v520, %v527
    %v533 = vadd.f32 %v521, %v527
    %v534 = vadd.f32 %v522, %v527
    %v535 = vadd.f32 %v523, %v527
    %v536 = vlaneseq
    %v537 = vshrl.u32 %v536, 7
    %v538 = vsub.s32 0, %v537
    %v539 = vrot.slane %v37, %v538
    %vm540 = vcmask 261120
    %v542 = vsel %vm540, %v528, 0
    %v545 = vsel %vm540, %v529, 0
    %v548 = vsel %vm540, %v530, 0
    %v551 = vsel %vm540, %v531, 0
    %v554 = vsel %vm540, %v532, 0
    %v557 = vsel %vm540, %v533, 0
    %v560 = vsel %vm540, %v534, 0
    %v563 = vsel %vm540, %v535, 0
    %565 = vmatprep.subr.mxu0 0.0
    %566 = vmatpush1.msra.mxu0 0.0
    %567 = vmatprep.subr.mxu0 0.0
    %568 = vmatpush1.msra.mxu0 0.0
    %569 = vmatprep.subr.mxu0 0.0
    %570 = vmatpush1.msra.mxu0 0.0
    %571 = vmatprep.subr.mxu0 0.0
    %572 = vmatpush1.msra.mxu0 0.0
    %573 = vmatprep.subr.mxu0 0.0
    %574 = vmatpush1.msra.mxu0 0.0
    %575 = vmatprep.subr.mxu0 0.0
    %576 = vmatpush1.msra.mxu0 0.0
    %577 = vmatprep.subr.mxu0 0.0
    %578 = vmatpush1.msra.mxu0 0.0
    %579 = vmatprep.subr.mxu0 0.0
    %580 = vmatpush1.msra.mxu0 0.0
    %581 = vmatprep.subr.mxu0 0.0
    %582 = vmatpush1.msra.mxu0 0.0
    %583 = vmatprep.subr.mxu0 0.0
    %584 = vmatpush1.msra.mxu0 0.0
    %585 = vmatprep.subr.mxu0 0.0
    %586 = vmatpush1.msra.mxu0 0.0
    %587 = vmatprep.subr.mxu0 0.0
    %588 = vmatpush1.msra.mxu0 0.0
    %589 = vmatprep.subr.mxu0 0.0
    %590 = vmatpush1.msra.mxu0 %v36
    %591 = vmatprep.subr.mxu0 0.0
    %592 = vmatpush1.msra.mxu0 %v35
    %593 = vmatprep.subr.mxu0 0.0
    %594 = vmatpush1.msra.mxu0 %v34
    %595 = vmatprep.subr.mxu0 0.0
    %596 = vmatpush1.msra.mxu0 %v33
    %597 = vmatprep.subr.mxu0 0.0
    %598 = vmatpush2.msra.mxu0 0.0
    %599 = vmatprep.subr.mxu0 0.0
    %600 = vmatpush2.msra.mxu0 0.0
    %601 = vmatprep.subr.mxu0 0.0
    %602 = vmatpush2.msra.mxu0 0.0
    %603 = vmatprep.subr.mxu0 0.0
    %604 = vmatpush2.msra.mxu0 0.0
    %605 = vmatprep.subr.mxu0 0.0
    %606 = vmatpush2.msra.mxu0 0.0
    %607 = vmatprep.subr.mxu0 0.0
    %608 = vmatpush2.msra.mxu0 0.0
    %609 = vmatprep.subr.mxu0 0.0
    %610 = vmatpush2.msra.mxu0 0.0
    %611 = vmatprep.subr.mxu0 0.0
    %612 = vmatpush2.msra.mxu0 0.0
    %613 = vmatprep.subr.mxu0 0.0
    %614 = vmatpush2.msra.mxu0 0.0
    %615 = vmatprep.subr.mxu0 0.0
    %616 = vmatpush2.msra.mxu0 0.0
    %617 = vmatprep.subr.mxu0 0.0
    %618 = vmatpush2.msra.mxu0 0.0
    %619 = vmatprep.subr.mxu0 0.0
    %620 = vmatpush2.msra.mxu0 0.0
    %621 = vmatprep.subr.mxu0 0.0
    %622 = vmatpush2.msra.mxu0 0.0
    %623 = vmatprep.subr.mxu0 0.0
    %624 = vmatpush2.msra.mxu0 0.0
    %625 = vmatprep.subr.mxu0 0.0
    %626 = vmatpush2.msra.mxu0 0.0
    %627 = vmatprep.subr.mxu0 0.0
    %628 = vmatpush2.msra.mxu0 0.0
    %629 = vmatprep.mubr.f32.mxu0 0.0
    %630 = vmatmul.mubr.f32.gmra.mxu0 %v542
    %v631 = vpop.f32.mrf.mxu0
    %v632 = vadd.f32 %v539, %v631
    %v633 = vpop.f32.mrf.mxu0
    %634 = vmatprep.mubr.f32.mxu0 0.0
    %635 = vmatmul.mubr.f32.gmra.mxu0 %v545
    %v636 = vpop.f32.mrf.mxu0
    %v637 = vadd.f32 %v539, %v636
    %v638 = vpop.f32.mrf.mxu0
    %639 = vmatprep.mubr.f32.mxu0 0.0
    %640 = vmatmul.mubr.f32.gmra.mxu0 %v548
    %v641 = vpop.f32.mrf.mxu0
    %v642 = vadd.f32 %v539, %v641
    %v643 = vpop.f32.mrf.mxu0
    %644 = vmatprep.mubr.f32.mxu0 0.0
    %645 = vmatmul.mubr.f32.gmra.mxu0 %v551
    %v646 = vpop.f32.mrf.mxu0
    %v647 = vadd.f32 %v539, %v646
    %v648 = vpop.f32.mrf.mxu0
    %649 = vmatprep.mubr.f32.mxu0 0.0
    %650 = vmatmul.mubr.f32.gmra.mxu0 %v554
    %v651 = vpop.f32.mrf.mxu0
    %v652 = vadd.f32 %v539, %v651
    %v653 = vpop.f32.mrf.mxu0
    %654 = vmatprep.mubr.f32.mxu0 0.0
    %655 = vmatmul.mubr.f32.gmra.mxu0 %v557
    %v656 = vpop.f32.mrf.mxu0
    %v657 = vadd.f32 %v539, %v656
    %v658 = vpop.f32.mrf.mxu0
    %659 = vmatprep.mubr.f32.mxu0 0.0
    %660 = vmatmul.mubr.f32.gmra.mxu0 %v560
    %v661 = vpop.f32.mrf.mxu0
    %v662 = vadd.f32 %v539, %v661
    %v663 = vpop.f32.mrf.mxu0
    %664 = vmatprep.mubr.f32.mxu0 0.0
    %665 = vmatmul.mubr.f32.gmra.mxu0 %v563
    %v666 = vpop.f32.mrf.mxu0
    %v667 = vadd.f32 %v539, %v666
    %v668 = vpop.f32.mrf.mxu0
    %669 = vdwg.mxu0
    %v670 = vld [vmem:[%s2] sm:$0xff]
    %v671 = vld [vmem:[%s2 + $0x8] sm:$0xff]
    %v672 = vld [vmem:[%s2 + $0x10] sm:$0xff]
    %v673 = vld [vmem:[%s2 + $0x18] sm:$0xff]
    %v674 = vld [vmem:[%s2 + $0x20] sm:$0xff]
    %v675 = vld [vmem:[%s2 + $0x28] sm:$0xff]
    %v676 = vld [vmem:[%s2 + $0x30] sm:$0xff]
    %v677 = vld [vmem:[%s2 + $0x38] sm:$0xff]
    %v678 = vld [vmem:[%s2 + $0x40] sm:$0xff]
    %v679 = vld [vmem:[%s2 + $0x48] sm:$0xff]
    %v680 = vld [vmem:[%s3] sm:$0xff]
    %v681 = vld [vmem:[%s3 + $0x8] sm:$0xff]
    %v682 = vld [vmem:[%s3 + $0x10] sm:$0xff]
    %v683 = vld [vmem:[%s3 + $0x18] sm:$0xff]
    %v684 = vld [vmem:[%s3 + $0x20] sm:$0xff]
    %v685 = vld [vmem:[%s3 + $0x28] sm:$0xff]
    %v686 = vld [vmem:[%s3 + $0x30] sm:$0xff]
    %v687 = vld [vmem:[%s3 + $0x38] sm:$0xff]
    %v688 = vld [vmem:[%s3 + $0x40] sm:$0xff]
    %v689 = vld [vmem:[%s3 + $0x48] sm:$0xff]
    %v690 = vpack.c.bf16 %v671, %v670
    %v691 = vpack.c.bf16 %v673, %v672
    %v692 = vpack.c.bf16 %v675, %v674
    %v693 = vpack.c.bf16 %v677, %v676
    %v694 = vpack.c.bf16 %v679, %v678
    %vm695 = vcmask 654336
    %v696 = vsel %vm695, 1065369472, 0
    %698 = vmatprep.subr.bf16.mxu0 0
    %699 = vmatpush1.bf16.msra.mxu0 0
    %700 = vmatprep.subr.bf16.mxu0 0
    %701 = vmatpush1.bf16.msra.mxu0 0
    %702 = vmatprep.subr.bf16.mxu0 0
    %703 = vmatpush1.bf16.msra.mxu0 0
    %704 = vmatprep.subr.bf16.mxu0 0
    %705 = vmatpush1.bf16.msra.mxu0 %v694
    %706 = vmatprep.subr.bf16.mxu0 0
    %707 = vmatpush1.bf16.msra.mxu0 %v693
    %708 = vmatprep.subr.bf16.mxu0 0
    %709 = vmatpush1.bf16.msra.mxu0 %v692
    %710 = vmatprep.subr.bf16.mxu0 0
    %711 = vmatpush1.bf16.msra.mxu0 %v691
    %712 = vmatprep.subr.bf16.mxu0 0
    %713 = vmatpush1.bf16.msra.mxu0 %v690
    %714 = vmatprep.subr.bf16.mxu0 0
    %715 = vmatpush2.bf16.msra.mxu0 0
    %716 = vmatprep.subr.bf16.mxu0 0
    %717 = vmatpush2.bf16.msra.mxu0 0
    %718 = vmatprep.subr.bf16.mxu0 0
    %719 = vmatpush2.bf16.msra.mxu0 0
    %720 = vmatprep.subr.bf16.mxu0 0
    %721 = vmatpush2.bf16.msra.mxu0 0
    %722 = vmatprep.subr.bf16.mxu0 0
    %723 = vmatpush2.bf16.msra.mxu0 0
    %724 = vmatprep.subr.bf16.mxu0 0
    %725 = vmatpush2.bf16.msra.mxu0 0
    %726 = vmatprep.subr.bf16.mxu0 0
    %727 = vmatpush2.bf16.msra.mxu0 0
    %728 = vmatprep.subr.bf16.mxu0 0
    %729 = vmatpush2.bf16.msra.mxu0 0
    %730 = vmatprep.mubr.bf16.mxu0 0
    %731 = vmatmul.mubr.bf16.gmra.mxu0 %v696
    %v732 = vpop.f32.mrf.mxu0
    %v733 = vadd.f32 0.0, %v732
    %v734 = vpop.f32.mrf.mxu0
    %v735 = vpop.f32.mrf.mxu0
    %v736 = vpop.f32.mrf.mxu0
    %737 = vdwg.mxu0
    %v739 = vsel %vm695, %v690, 0
    %v742 = vsel %vm695, %v691, 0
    %v745 = vsel %vm695, %v692, 0
    %v748 = vsel %vm695, %v693, 0
    %v751 = vsel %vm695, %v694, 0
    %753 = vmatprep.subr.bf16.mxu0 0
    %754 = vmatpush1.bf16.msra.mxu0 0
    %755 = vmatprep.subr.bf16.mxu0 0
    %756 = vmatpush1.bf16.msra.mxu0 0
    %757 = vmatprep.subr.bf16.mxu0 0
    %758 = vmatpush1.bf16.msra.mxu0 0
    %759 = vmatprep.subr.bf16.mxu0 0
    %760 = vmatpush1.bf16.msra.mxu0 1065369472
    %761 = vmatprep.subr.bf16.mxu0 0
    %762 = vmatpush1.bf16.msra.mxu0 1065369472
    %763 = vmatprep.subr.bf16.mxu0 0
    %764 = vmatpush1.bf16.msra.mxu0 1065369472
    %765 = vmatprep.subr.bf16.mxu0 0
    %766 = vmatpush1.bf16.msra.mxu0 1065369472
    %767 = vmatprep.subr.bf16.mxu0 0
    %768 = vmatpush1.bf16.msra.mxu0 1065369472
    %769 = vmatprep.subr.bf16.mxu0 0
    %770 = vmatpush2.bf16.msra.mxu0 0
    %771 = vmatprep.subr.bf16.mxu0 0
    %772 = vmatpush2.bf16.msra.mxu0 0
    %773 = vmatprep.subr.bf16.mxu0 0
    %774 = vmatpush2.bf16.msra.mxu0 0
    %775 = vmatprep.subr.bf16.mxu0 0
    %776 = vmatpush2.bf16.msra.mxu0 0
    %777 = vmatprep.subr.bf16.mxu0 0
    %778 = vmatpush2.bf16.msra.mxu0 0
    %779 = vmatprep.subr.bf16.mxu0 0
    %780 = vmatpush2.bf16.msra.mxu0 0
    %781 = vmatprep.subr.bf16.mxu0 0
    %782 = vmatpush2.bf16.msra.mxu0 0
    %783 = vmatprep.subr.bf16.mxu0 0
    %784 = vmatpush2.bf16.msra.mxu0 0
    %785 = vmatprep.mubr.bf16.mxu0 0
    %786 = vmatmul.mubr.bf16.gmra.mxu0 %v739
    %v787 = vpop.f32.mrf.mxu0
    %v788 = vadd.f32 0.0, %v787
    %v789 = vpop.f32.mrf.mxu0
    %v790 = vpop.f32.mrf.mxu0
    %v791 = vadd.f32 0.0, %v790
    %v792 = vpop.f32.mrf.mxu0
    %793 = vmatprep.mubr.bf16.mxu0 0
    %794 = vmatmul.mubr.bf16.gmra.mxu0 %v742
    %v795 = vpop.f32.mrf.mxu0
    %v796 = vadd.f32 0.0, %v795
    %v797 = vpop.f32.mrf.mxu0
    %v798 = vpop.f32.mrf.mxu0
    %v799 = vadd.f32 0.0, %v798
    %v800 = vpop.f32.mrf.mxu0
    %801 = vmatprep.mubr.bf16.mxu0 0
    %802 = vmatmul.mubr.bf16.gmra.mxu0 %v745
    %v803 = vpop.f32.mrf.mxu0
    %v804 = vadd.f32 0.0, %v803
    %v805 = vpop.f32.mrf.mxu0
    %v806 = vpop.f32.mrf.mxu0
    %v807 = vadd.f32 0.0, %v806
    %v808 = vpop.f32.mrf.mxu0
    %809 = vmatprep.mubr.bf16.mxu0 0
    %810 = vmatmul.mubr.bf16.gmra.mxu0 %v748
    %v811 = vpop.f32.mrf.mxu0
    %v812 = vadd.f32 0.0, %v811
    %v813 = vpop.f32.mrf.mxu0
    %v814 = vpop.f32.mrf.mxu0
    %v815 = vadd.f32 0.0, %v814
    %v816 = vpop.f32.mrf.mxu0
    %817 = vmatprep.mubr.bf16.mxu0 0
    %818 = vmatmul.mubr.bf16.gmra.mxu0 %v751
    %v819 = vpop.f32.mrf.mxu0
    %v820 = vadd.f32 0.0, %v819
    %v821 = vpop.f32.mrf.mxu0
    %v822 = vpop.f32.mrf.mxu0
    %v823 = vadd.f32 0.0, %v822
    %v824 = vpop.f32.mrf.mxu0
    %825 = vdwg.mxu0
    %v826 = vmax.f32 %v733, 1.0
    %v827 = vrsqrt.pop %v826
    %v828 = vmax.f32 %v788, 1.0
    %v829 = vmax.f32 %v791, 1.0
    %v830 = vmax.f32 %v796, 1.0
    %v831 = vmax.f32 %v799, 1.0
    %v832 = vmax.f32 %v804, 1.0
    %v833 = vmax.f32 %v807, 1.0
    %v834 = vmax.f32 %v812, 1.0
    %v835 = vmax.f32 %v815, 1.0
    %v836 = vmax.f32 %v820, 1.0
    %v837 = vmax.f32 %v823, 1.0
    %v838 = vrsqrt.pop %v828
    %v839 = vrsqrt.pop %v829
    %v840 = vrsqrt.pop %v830
    %v841 = vrsqrt.pop %v831
    %v842 = vrsqrt.pop %v832
    %v843 = vrsqrt.pop %v833
    %v844 = vrsqrt.pop %v834
    %v845 = vrsqrt.pop %v835
    %v846 = vrsqrt.pop %v836
    %v847 = vrsqrt.pop %v837
    %v848 = vlaneseq
    %v849 = vshrl.u32 %v848, 7
    %v850 = vsub.s32 0, %v849
    %v851 = vrot.slane %v827, %v850
    %v852 = vmul.f32 %v670, %v851
    %v853 = vmul.f32 %v671, %v851
    %v854 = vmul.f32 %v672, %v851
    %v855 = vmul.f32 %v673, %v851
    %v856 = vmul.f32 %v674, %v851
    %v857 = vmul.f32 %v675, %v851
    %v858 = vmul.f32 %v676, %v851
    %v859 = vmul.f32 %v677, %v851
    %v860 = vmul.f32 %v678, %v851
    %v861 = vmul.f32 %v679, %v851
    %v863 = vsel %vm695, %v852, 0
    %v866 = vsel %vm695, %v853, 0
    %v869 = vsel %vm695, %v854, 0
    %v872 = vsel %vm695, %v855, 0
    %v875 = vsel %vm695, %v856, 0
    %v878 = vsel %vm695, %v857, 0
    %v881 = vsel %vm695, %v858, 0
    %v884 = vsel %vm695, %v859, 0
    %v887 = vsel %vm695, %v860, 0
    %v890 = vsel %vm695, %v861, 0
    %892 = vmatprep.subr.mxu0 0.0
    %893 = vmatpush1.msra.mxu0 0.0
    %894 = vmatprep.subr.mxu0 0.0
    %895 = vmatpush1.msra.mxu0 0.0
    %896 = vmatprep.subr.mxu0 0.0
    %897 = vmatpush1.msra.mxu0 0.0
    %898 = vmatprep.subr.mxu0 0.0
    %899 = vmatpush1.msra.mxu0 0.0
    %900 = vmatprep.subr.mxu0 0.0
    %901 = vmatpush1.msra.mxu0 0.0
    %902 = vmatprep.subr.mxu0 0.0
    %903 = vmatpush1.msra.mxu0 0.0
    %904 = vmatprep.subr.mxu0 0.0
    %905 = vmatpush1.msra.mxu0 %v689
    %906 = vmatprep.subr.mxu0 0.0
    %907 = vmatpush1.msra.mxu0 %v688
    %908 = vmatprep.subr.mxu0 0.0
    %909 = vmatpush1.msra.mxu0 %v687
    %910 = vmatprep.subr.mxu0 0.0
    %911 = vmatpush1.msra.mxu0 %v686
    %912 = vmatprep.subr.mxu0 0.0
    %913 = vmatpush1.msra.mxu0 %v685
    %914 = vmatprep.subr.mxu0 0.0
    %915 = vmatpush1.msra.mxu0 %v684
    %916 = vmatprep.subr.mxu0 0.0
    %917 = vmatpush1.msra.mxu0 %v683
    %918 = vmatprep.subr.mxu0 0.0
    %919 = vmatpush1.msra.mxu0 %v682
    %920 = vmatprep.subr.mxu0 0.0
    %921 = vmatpush1.msra.mxu0 %v681
    %922 = vmatprep.subr.mxu0 0.0
    %923 = vmatpush1.msra.mxu0 %v680
    %924 = vmatprep.subr.mxu0 0.0
    %925 = vmatpush2.msra.mxu0 0.0
    %926 = vmatprep.subr.mxu0 0.0
    %927 = vmatpush2.msra.mxu0 0.0
    %928 = vmatprep.subr.mxu0 0.0
    %929 = vmatpush2.msra.mxu0 0.0
    %930 = vmatprep.subr.mxu0 0.0
    %931 = vmatpush2.msra.mxu0 0.0
    %932 = vmatprep.subr.mxu0 0.0
    %933 = vmatpush2.msra.mxu0 0.0
    %934 = vmatprep.subr.mxu0 0.0
    %935 = vmatpush2.msra.mxu0 0.0
    %936 = vmatprep.subr.mxu0 0.0
    %937 = vmatpush2.msra.mxu0 0.0
    %938 = vmatprep.subr.mxu0 0.0
    %939 = vmatpush2.msra.mxu0 0.0
    %940 = vmatprep.subr.mxu0 0.0
    %941 = vmatpush2.msra.mxu0 0.0
    %942 = vmatprep.subr.mxu0 0.0
    %943 = vmatpush2.msra.mxu0 0.0
    %944 = vmatprep.subr.mxu0 0.0
    %945 = vmatpush2.msra.mxu0 0.0
    %946 = vmatprep.subr.mxu0 0.0
    %947 = vmatpush2.msra.mxu0 0.0
    %948 = vmatprep.subr.mxu0 0.0
    %949 = vmatpush2.msra.mxu0 0.0
    %950 = vmatprep.subr.mxu0 0.0
    %951 = vmatpush2.msra.mxu0 0.0
    %952 = vmatprep.subr.mxu0 0.0
    %953 = vmatpush2.msra.mxu0 0.0
    %954 = vmatprep.subr.mxu0 0.0
    %955 = vmatpush2.msra.mxu0 0.0
    %956 = vmatprep.mubr.f32.mxu0 0.0
    %957 = vmatmul.mubr.f32.gmra.mxu0 %v863
    %v958 = vpop.f32.mrf.mxu0
    %v959 = vadd.f32 0.0, %v958
    %v960 = vpop.f32.mrf.mxu0
    %961 = vmatprep.mubr.f32.mxu0 0.0
    %962 = vmatmul.mubr.f32.gmra.mxu0 %v866
    %v963 = vpop.f32.mrf.mxu0
    %v964 = vadd.f32 0.0, %v963
    %v965 = vpop.f32.mrf.mxu0
    %966 = vmatprep.mubr.f32.mxu0 0.0
    %967 = vmatmul.mubr.f32.gmra.mxu0 %v869
    %v968 = vpop.f32.mrf.mxu0
    %v969 = vadd.f32 0.0, %v968
    %v970 = vpop.f32.mrf.mxu0
    %971 = vmatprep.mubr.f32.mxu0 0.0
    %972 = vmatmul.mubr.f32.gmra.mxu0 %v872
    %v973 = vpop.f32.mrf.mxu0
    %v974 = vadd.f32 0.0, %v973
    %v975 = vpop.f32.mrf.mxu0
    %976 = vmatprep.mubr.f32.mxu0 0.0
    %977 = vmatmul.mubr.f32.gmra.mxu0 %v875
    %v978 = vpop.f32.mrf.mxu0
    %v979 = vadd.f32 0.0, %v978
    %v980 = vpop.f32.mrf.mxu0
    %981 = vmatprep.mubr.f32.mxu0 0.0
    %982 = vmatmul.mubr.f32.gmra.mxu0 %v878
    %v983 = vpop.f32.mrf.mxu0
    %v984 = vadd.f32 0.0, %v983
    %v985 = vpop.f32.mrf.mxu0
    %986 = vmatprep.mubr.f32.mxu0 0.0
    %987 = vmatmul.mubr.f32.gmra.mxu0 %v881
    %v988 = vpop.f32.mrf.mxu0
    %v989 = vadd.f32 0.0, %v988
    %v990 = vpop.f32.mrf.mxu0
    %991 = vmatprep.mubr.f32.mxu0 0.0
    %992 = vmatmul.mubr.f32.gmra.mxu0 %v884
    %v993 = vpop.f32.mrf.mxu0
    %v994 = vadd.f32 0.0, %v993
    %v995 = vpop.f32.mrf.mxu0
    %996 = vmatprep.mubr.f32.mxu0 0.0
    %997 = vmatmul.mubr.f32.gmra.mxu0 %v887
    %v998 = vpop.f32.mrf.mxu0
    %v999 = vadd.f32 0.0, %v998
    %v1000 = vpop.f32.mrf.mxu0
    %1001 = vmatprep.mubr.f32.mxu0 0.0
    %1002 = vmatmul.mubr.f32.gmra.mxu0 %v890
    %v1003 = vpop.f32.mrf.mxu0
    %v1004 = vadd.f32 0.0, %v1003
    %v1005 = vpop.f32.mrf.mxu0
    %1006 = vdwg.mxu0
    %vm1007 = vcmask 130048
    %v1009 = vsel %vm1007, %v959, 0
    %v1012 = vsel %vm1007, %v964, 0
    %v1015 = vsel %vm1007, %v969, 0
    %v1018 = vsel %vm1007, %v974, 0
    %v1021 = vsel %vm1007, %v979, 0
    %v1024 = vsel %vm1007, %v984, 0
    %v1027 = vsel %vm1007, %v989, 0
    %v1030 = vsel %vm1007, %v994, 0
    %v1033 = vsel %vm1007, %v999, 0
    %v1036 = vsel %vm1007, %v1004, 0
    %1038 = vmatprep.subr.mxu0 0.0
    %1039 = vmatpush1.msra.mxu0 0.0
    %1040 = vmatprep.subr.mxu0 0.0
    %1041 = vmatpush1.msra.mxu0 0.0
    %1042 = vmatprep.subr.mxu0 0.0
    %1043 = vmatpush1.msra.mxu0 0.0
    %1044 = vmatprep.subr.mxu0 0.0
    %1045 = vmatpush1.msra.mxu0 0.0
    %1046 = vmatprep.subr.mxu0 0.0
    %1047 = vmatpush1.msra.mxu0 0.0
    %1048 = vmatprep.subr.mxu0 0.0
    %1049 = vmatpush1.msra.mxu0 0.0
    %1050 = vmatprep.subr.mxu0 0.0
    %1051 = vmatpush1.msra.mxu0 0.0
    %1052 = vmatprep.subr.mxu0 0.0
    %1053 = vmatpush1.msra.mxu0 0.0
    %1054 = vmatprep.subr.mxu0 0.0
    %1055 = vmatpush1.msra.mxu0 0.0
    %1056 = vmatprep.subr.mxu0 0.0
    %1057 = vmatpush1.msra.mxu0 0.0
    %1058 = vmatprep.subr.mxu0 0.0
    %1059 = vmatpush1.msra.mxu0 0.0
    %1060 = vmatprep.subr.mxu0 0.0
    %1061 = vmatpush1.msra.mxu0 0.0
    %1062 = vmatprep.subr.mxu0 0.0
    %1063 = vmatpush1.msra.mxu0 0.0
    %1064 = vmatprep.subr.mxu0 0.0
    %1065 = vmatpush1.msra.mxu0 0.0
    %1066 = vmatprep.subr.mxu0 0.0
    %1067 = vmatpush1.msra.mxu0 %v39
    %1068 = vmatprep.subr.mxu0 0.0
    %1069 = vmatpush1.msra.mxu0 %v38
    %1070 = vmatprep.subr.mxu0 0.0
    %1071 = vmatpush2.msra.mxu0 0.0
    %1072 = vmatprep.subr.mxu0 0.0
    %1073 = vmatpush2.msra.mxu0 0.0
    %1074 = vmatprep.subr.mxu0 0.0
    %1075 = vmatpush2.msra.mxu0 0.0
    %1076 = vmatprep.subr.mxu0 0.0
    %1077 = vmatpush2.msra.mxu0 0.0
    %1078 = vmatprep.subr.mxu0 0.0
    %1079 = vmatpush2.msra.mxu0 0.0
    %1080 = vmatprep.subr.mxu0 0.0
    %1081 = vmatpush2.msra.mxu0 0.0
    %1082 = vmatprep.subr.mxu0 0.0
    %1083 = vmatpush2.msra.mxu0 0.0
    %1084 = vmatprep.subr.mxu0 0.0
    %1085 = vmatpush2.msra.mxu0 0.0
    %1086 = vmatprep.subr.mxu0 0.0
    %1087 = vmatpush2.msra.mxu0 0.0
    %1088 = vmatprep.subr.mxu0 0.0
    %1089 = vmatpush2.msra.mxu0 0.0
    %1090 = vmatprep.subr.mxu0 0.0
    %1091 = vmatpush2.msra.mxu0 0.0
    %1092 = vmatprep.subr.mxu0 0.0
    %1093 = vmatpush2.msra.mxu0 0.0
    %1094 = vmatprep.subr.mxu0 0.0
    %1095 = vmatpush2.msra.mxu0 0.0
    %1096 = vmatprep.subr.mxu0 0.0
    %1097 = vmatpush2.msra.mxu0 0.0
    %1098 = vmatprep.subr.mxu0 0.0
    %1099 = vmatpush2.msra.mxu0 0.0
    %1100 = vmatprep.subr.mxu0 0.0
    %1101 = vmatpush2.msra.mxu0 0.0
    %1102 = vmatprep.mubr.f32.mxu0 0.0
    %1103 = vmatmul.mubr.f32.gmra.mxu0 %v1009
    %v1104 = vpop.f32.mrf.mxu0
    %v1105 = vadd.f32 0.0, %v1104
    %v1106 = vpop.f32.mrf.mxu0
    %1107 = vmatprep.mubr.f32.mxu0 0.0
    %1108 = vmatmul.mubr.f32.gmra.mxu0 %v1012
    %v1109 = vpop.f32.mrf.mxu0
    %v1110 = vadd.f32 0.0, %v1109
    %v1111 = vpop.f32.mrf.mxu0
    %1112 = vmatprep.mubr.f32.mxu0 0.0
    %1113 = vmatmul.mubr.f32.gmra.mxu0 %v1015
    %v1114 = vpop.f32.mrf.mxu0
    %v1115 = vadd.f32 0.0, %v1114
    %v1116 = vpop.f32.mrf.mxu0
    %1117 = vmatprep.mubr.f32.mxu0 0.0
    %1118 = vmatmul.mubr.f32.gmra.mxu0 %v1018
    %v1119 = vpop.f32.mrf.mxu0
    %v1120 = vadd.f32 0.0, %v1119
    %v1121 = vpop.f32.mrf.mxu0
    %1122 = vmatprep.mubr.f32.mxu0 0.0
    %1123 = vmatmul.mubr.f32.gmra.mxu0 %v1021
    %v1124 = vpop.f32.mrf.mxu0
    %v1125 = vadd.f32 0.0, %v1124
    %v1126 = vpop.f32.mrf.mxu0
    %1127 = vmatprep.mubr.f32.mxu0 0.0
    %1128 = vmatmul.mubr.f32.gmra.mxu0 %v1024
    %v1129 = vpop.f32.mrf.mxu0
    %v1130 = vadd.f32 0.0, %v1129
    %v1131 = vpop.f32.mrf.mxu0
    %1132 = vmatprep.mubr.f32.mxu0 0.0
    %1133 = vmatmul.mubr.f32.gmra.mxu0 %v1027
    %v1134 = vpop.f32.mrf.mxu0
    %v1135 = vadd.f32 0.0, %v1134
    %v1136 = vpop.f32.mrf.mxu0
    %1137 = vmatprep.mubr.f32.mxu0 0.0
    %1138 = vmatmul.mubr.f32.gmra.mxu0 %v1030
    %v1139 = vpop.f32.mrf.mxu0
    %v1140 = vadd.f32 0.0, %v1139
    %v1141 = vpop.f32.mrf.mxu0
    %1142 = vmatprep.mubr.f32.mxu0 0.0
    %1143 = vmatmul.mubr.f32.gmra.mxu0 %v1033
    %v1144 = vpop.f32.mrf.mxu0
    %v1145 = vadd.f32 0.0, %v1144
    %v1146 = vpop.f32.mrf.mxu0
    %1147 = vmatprep.mubr.f32.mxu0 0.0
    %1148 = vmatmul.mubr.f32.gmra.mxu0 %v1036
    %v1149 = vpop.f32.mrf.mxu0
    %v1150 = vadd.f32 0.0, %v1149
    %v1151 = vpop.f32.mrf.mxu0
    %1152 = vdwg.mxu0
    %1154 = vset.pattern.permute.xlu0 0
    %1155 = vperm.xlu0 %1154, %v838
    %v1156 = vpop.permute.xlu0 %1155
    %1159 = vset.pattern.permute.xlu0 0
    %1160 = vperm.xlu0 %1159, %v839
    %v1161 = vpop.permute.xlu0 %1160
    %1164 = vset.pattern.permute.xlu0 0
    %1165 = vperm.xlu0 %1164, %v840
    %v1166 = vpop.permute.xlu0 %1165
    %1169 = vset.pattern.permute.xlu0 0
    %1170 = vperm.xlu0 %1169, %v841
    %v1171 = vpop.permute.xlu0 %1170
    %1174 = vset.pattern.permute.xlu0 0
    %1175 = vperm.xlu0 %1174, %v842
    %v1176 = vpop.permute.xlu0 %1175
    %1179 = vset.pattern.permute.xlu0 0
    %1180 = vperm.xlu0 %1179, %v843
    %v1181 = vpop.permute.xlu0 %1180
    %1184 = vset.pattern.permute.xlu0 0
    %1185 = vperm.xlu0 %1184, %v844
    %v1186 = vpop.permute.xlu0 %1185
    %1189 = vset.pattern.permute.xlu0 0
    %1190 = vperm.xlu0 %1189, %v845
    %v1191 = vpop.permute.xlu0 %1190
    %1194 = vset.pattern.permute.xlu0 0
    %1195 = vperm.xlu0 %1194, %v846
    %v1196 = vpop.permute.xlu0 %1195
    %1199 = vset.pattern.permute.xlu0 0
    %1200 = vperm.xlu0 %1199, %v847
    %v1201 = vpop.permute.xlu0 %1200
    %v1203 = vmul.f32 %v1105, %v1156
    %v1204 = vmul.f32 %v1110, %v1161
    %v1205 = vmul.f32 %v1115, %v1166
    %v1206 = vmul.f32 %v1120, %v1171
    %v1207 = vmul.f32 %v1125, %v1176
    %v1208 = vmul.f32 %v1130, %v1181
    %v1209 = vmul.f32 %v1135, %v1186
    %v1210 = vmul.f32 %v1140, %v1191
    %v1211 = vmul.f32 %v1145, %v1196
    %v1212 = vmul.f32 %v1150, %v1201
    %v1213 = vlaneseq
    %v1214 = vshrl.u32 %v1213, 7
    %v1215 = vsub.s32 0, %v1214
    %v1216 = vrot.slane %v40, %v1215
    %v1217 = vadd.f32 %v1203, %v1216
    %v1218 = vadd.f32 %v1204, %v1216
    %v1219 = vadd.f32 %v1205, %v1216
    %v1220 = vadd.f32 %v1206, %v1216
    %v1221 = vadd.f32 %v1207, %v1216
    %v1222 = vadd.f32 %v1208, %v1216
    %v1223 = vadd.f32 %v1209, %v1216
    %v1224 = vadd.f32 %v1210, %v1216
    %v1225 = vadd.f32 %v1211, %v1216
    %v1226 = vadd.f32 %v1212, %v1216
    %v1227 = vlaneseq
    %v1228 = vshrl.u32 %v1227, 7
    %v1229 = vsub.s32 0, %v1228
    %v1230 = vrot.slane %v45, %v1229
    %v1232 = vsel %vm540, %v1217, 0
    %v1235 = vsel %vm540, %v1218, 0
    %v1238 = vsel %vm540, %v1219, 0
    %v1241 = vsel %vm540, %v1220, 0
    %v1244 = vsel %vm540, %v1221, 0
    %v1247 = vsel %vm540, %v1222, 0
    %v1250 = vsel %vm540, %v1223, 0
    %v1253 = vsel %vm540, %v1224, 0
    %v1256 = vsel %vm540, %v1225, 0
    %v1259 = vsel %vm540, %v1226, 0
    %1261 = vmatprep.subr.mxu0 0.0
    %1262 = vmatpush1.msra.mxu0 0.0
    %1263 = vmatprep.subr.mxu0 0.0
    %1264 = vmatpush1.msra.mxu0 0.0
    %1265 = vmatprep.subr.mxu0 0.0
    %1266 = vmatpush1.msra.mxu0 0.0
    %1267 = vmatprep.subr.mxu0 0.0
    %1268 = vmatpush1.msra.mxu0 0.0
    %1269 = vmatprep.subr.mxu0 0.0
    %1270 = vmatpush1.msra.mxu0 0.0
    %1271 = vmatprep.subr.mxu0 0.0
    %1272 = vmatpush1.msra.mxu0 0.0
    %1273 = vmatprep.subr.mxu0 0.0
    %1274 = vmatpush1.msra.mxu0 0.0
    %1275 = vmatprep.subr.mxu0 0.0
    %1276 = vmatpush1.msra.mxu0 0.0
    %1277 = vmatprep.subr.mxu0 0.0
    %1278 = vmatpush1.msra.mxu0 0.0
    %1279 = vmatprep.subr.mxu0 0.0
    %1280 = vmatpush1.msra.mxu0 0.0
    %1281 = vmatprep.subr.mxu0 0.0
    %1282 = vmatpush1.msra.mxu0 0.0
    %1283 = vmatprep.subr.mxu0 0.0
    %1284 = vmatpush1.msra.mxu0 0.0
    %1285 = vmatprep.subr.mxu0 0.0
    %1286 = vmatpush1.msra.mxu0 %v44
    %1287 = vmatprep.subr.mxu0 0.0
    %1288 = vmatpush1.msra.mxu0 %v43
    %1289 = vmatprep.subr.mxu0 0.0
    %1290 = vmatpush1.msra.mxu0 %v42
    %1291 = vmatprep.subr.mxu0 0.0
    %1292 = vmatpush1.msra.mxu0 %v41
    %1293 = vmatprep.subr.mxu0 0.0
    %1294 = vmatpush2.msra.mxu0 0.0
    %1295 = vmatprep.subr.mxu0 0.0
    %1296 = vmatpush2.msra.mxu0 0.0
    %1297 = vmatprep.subr.mxu0 0.0
    %1298 = vmatpush2.msra.mxu0 0.0
    %1299 = vmatprep.subr.mxu0 0.0
    %1300 = vmatpush2.msra.mxu0 0.0
    %1301 = vmatprep.subr.mxu0 0.0
    %1302 = vmatpush2.msra.mxu0 0.0
    %1303 = vmatprep.subr.mxu0 0.0
    %1304 = vmatpush2.msra.mxu0 0.0
    %1305 = vmatprep.subr.mxu0 0.0
    %1306 = vmatpush2.msra.mxu0 0.0
    %1307 = vmatprep.subr.mxu0 0.0
    %1308 = vmatpush2.msra.mxu0 0.0
    %1309 = vmatprep.subr.mxu0 0.0
    %1310 = vmatpush2.msra.mxu0 0.0
    %1311 = vmatprep.subr.mxu0 0.0
    %1312 = vmatpush2.msra.mxu0 0.0
    %1313 = vmatprep.subr.mxu0 0.0
    %1314 = vmatpush2.msra.mxu0 0.0
    %1315 = vmatprep.subr.mxu0 0.0
    %1316 = vmatpush2.msra.mxu0 0.0
    %1317 = vmatprep.subr.mxu0 0.0
    %1318 = vmatpush2.msra.mxu0 0.0
    %1319 = vmatprep.subr.mxu0 0.0
    %1320 = vmatpush2.msra.mxu0 0.0
    %1321 = vmatprep.subr.mxu0 0.0
    %1322 = vmatpush2.msra.mxu0 0.0
    %1323 = vmatprep.subr.mxu0 0.0
    %1324 = vmatpush2.msra.mxu0 0.0
    %1325 = vmatprep.mubr.f32.mxu0 0.0
    %1326 = vmatmul.mubr.f32.gmra.mxu0 %v1232
    %v1327 = vpop.f32.mrf.mxu0
    %v1328 = vadd.f32 %v1230, %v1327
    %v1329 = vpop.f32.mrf.mxu0
    %1330 = vmatprep.mubr.f32.mxu0 0.0
    %1331 = vmatmul.mubr.f32.gmra.mxu0 %v1235
    %v1332 = vpop.f32.mrf.mxu0
    %v1333 = vadd.f32 %v1230, %v1332
    %v1334 = vpop.f32.mrf.mxu0
    %1335 = vmatprep.mubr.f32.mxu0 0.0
    %1336 = vmatmul.mubr.f32.gmra.mxu0 %v1238
    %v1337 = vpop.f32.mrf.mxu0
    %v1338 = vadd.f32 %v1230, %v1337
    %v1339 = vpop.f32.mrf.mxu0
    %1340 = vmatprep.mubr.f32.mxu0 0.0
    %1341 = vmatmul.mubr.f32.gmra.mxu0 %v1241
    %v1342 = vpop.f32.mrf.mxu0
    %v1343 = vadd.f32 %v1230, %v1342
    %v1344 = vpop.f32.mrf.mxu0
    %1345 = vmatprep.mubr.f32.mxu0 0.0
    %1346 = vmatmul.mubr.f32.gmra.mxu0 %v1244
    %v1347 = vpop.f32.mrf.mxu0
    %v1348 = vadd.f32 %v1230, %v1347
    %v1349 = vpop.f32.mrf.mxu0
    %1350 = vmatprep.mubr.f32.mxu0 0.0
    %1351 = vmatmul.mubr.f32.gmra.mxu0 %v1247
    %v1352 = vpop.f32.mrf.mxu0
    %v1353 = vadd.f32 %v1230, %v1352
    %v1354 = vpop.f32.mrf.mxu0
    %1355 = vmatprep.mubr.f32.mxu0 0.0
    %1356 = vmatmul.mubr.f32.gmra.mxu0 %v1250
    %v1357 = vpop.f32.mrf.mxu0
    %v1358 = vadd.f32 %v1230, %v1357
    %v1359 = vpop.f32.mrf.mxu0
    %1360 = vmatprep.mubr.f32.mxu0 0.0
    %1361 = vmatmul.mubr.f32.gmra.mxu0 %v1253
    %v1362 = vpop.f32.mrf.mxu0
    %v1363 = vadd.f32 %v1230, %v1362
    %v1364 = vpop.f32.mrf.mxu0
    %1365 = vmatprep.mubr.f32.mxu0 0.0
    %1366 = vmatmul.mubr.f32.gmra.mxu0 %v1256
    %v1367 = vpop.f32.mrf.mxu0
    %v1368 = vadd.f32 %v1230, %v1367
    %v1369 = vpop.f32.mrf.mxu0
    %1370 = vmatprep.mubr.f32.mxu0 0.0
    %1371 = vmatmul.mubr.f32.gmra.mxu0 %v1259
    %v1372 = vpop.f32.mrf.mxu0
    %v1373 = vadd.f32 %v1230, %v1372
    %v1374 = vpop.f32.mrf.mxu0
    %1375 = vdwg.mxu0
    %v1376 = vld [vmem:[%s5] sm:$0xff]
    %v1377 = vld [vmem:[%s5 + $0x8] sm:$0xff]
    %v1378 = vld [vmem:[%s5 + $0x10] sm:$0xff]
    %v1379 = vld [vmem:[%s5 + $0x18] sm:$0xff]
    %v1380 = vlaneseq
    %v1381 = vand.u32 %v1380, 127
    %1382 = vset.pattern.permute.xlu0 0
    %1383 = vperm.xlu0 %1382, %v1376
    %v1384 = vpop.permute.xlu0 %1383
    %1385 = vset.pattern.permute.xlu0 0
    %1386 = vperm.xlu0 %1385, %v1377
    %v1387 = vpop.permute.xlu0 %1386
    %1388 = vset.pattern.permute.xlu0 0
    %1389 = vperm.xlu0 %1388, %v1378
    %v1390 = vpop.permute.xlu0 %1389
    %1391 = vset.pattern.permute.xlu0 0
    %1392 = vperm.xlu0 %1391, %v1379
    %v1393 = vpop.permute.xlu0 %1392
    %vm1394 = vcmp.eq.s32.totalorder %v1381, %v1384
    %vm1395 = vcmp.eq.s32.totalorder %v1381, %v1387
    %vm1396 = vcmp.eq.s32.totalorder %v1381, %v1390
    %vm1397 = vcmp.eq.s32.totalorder %v1381, %v1393
    %v1398 = vsel %vm1394, 1, 0
    %v1399 = vsel %vm1395, 1, 0
    %v1400 = vsel %vm1396, 1, 0
    %v1401 = vsel %vm1397, 1, 0
    %v1402 = vcvt.s32.f32 %v1398
    %v1403 = vcvt.s32.f32 %v1399
    %v1404 = vcvt.s32.f32 %v1400
    %v1405 = vcvt.s32.f32 %v1401
    %1406 = vset.pattern.permute.xlu0 1
    %1407 = vperm.xlu0 %1406, %v1376
    %v1408 = vpop.permute.xlu0 %1407
    %1409 = vset.pattern.permute.xlu0 1
    %1410 = vperm.xlu0 %1409, %v1377
    %v1411 = vpop.permute.xlu0 %1410
    %1412 = vset.pattern.permute.xlu0 1
    %1413 = vperm.xlu0 %1412, %v1378
    %v1414 = vpop.permute.xlu0 %1413
    %1415 = vset.pattern.permute.xlu0 1
    %1416 = vperm.xlu0 %1415, %v1379
    %v1417 = vpop.permute.xlu0 %1416
    %vm1418 = vcmp.eq.s32.totalorder %v1381, %v1408
    %vm1419 = vcmp.eq.s32.totalorder %v1381, %v1411
    %vm1420 = vcmp.eq.s32.totalorder %v1381, %v1414
    %vm1421 = vcmp.eq.s32.totalorder %v1381, %v1417
    %v1422 = vsel %vm1418, 1, 0
    %v1423 = vsel %vm1419, 1, 0
    %v1424 = vsel %vm1420, 1, 0
    %v1425 = vsel %vm1421, 1, 0
    %v1426 = vcvt.s32.f32 %v1422
    %v1427 = vcvt.s32.f32 %v1423
    %v1428 = vcvt.s32.f32 %v1424
    %v1429 = vcvt.s32.f32 %v1425
    %v1431 = vsel %vm66, %v1402, 0
    %v1434 = vsel %vm66, %v1403, 0
    %v1437 = vsel %vm66, %v1404, 0
    %v1440 = vsel %vm66, %v1405, 0
    %1442 = vmatprep.subr.mxu0 0.0
    %1443 = vmatpush1.msra.mxu0 0.0
    %1444 = vmatprep.subr.mxu0 0.0
    %1445 = vmatpush1.msra.mxu0 0.0
    %1446 = vmatprep.subr.mxu0 0.0
    %1447 = vmatpush1.msra.mxu0 0.0
    %1448 = vmatprep.subr.mxu0 0.0
    %1449 = vmatpush1.msra.mxu0 0.0
    %1450 = vmatprep.subr.mxu0 0.0
    %1451 = vmatpush1.msra.mxu0 0.0
    %1452 = vmatprep.subr.mxu0 0.0
    %1453 = vmatpush1.msra.mxu0 0.0
    %1454 = vmatprep.subr.mxu0 0.0
    %1455 = vmatpush1.msra.mxu0 0.0
    %1456 = vmatprep.subr.mxu0 0.0
    %1457 = vmatpush1.msra.mxu0 0.0
    %1458 = vmatprep.subr.mxu0 0.0
    %1459 = vmatpush1.msra.mxu0 %v667
    %1460 = vmatprep.subr.mxu0 0.0
    %1461 = vmatpush1.msra.mxu0 %v662
    %1462 = vmatprep.subr.mxu0 0.0
    %1463 = vmatpush1.msra.mxu0 %v657
    %1464 = vmatprep.subr.mxu0 0.0
    %1465 = vmatpush1.msra.mxu0 %v652
    %1466 = vmatprep.subr.mxu0 0.0
    %1467 = vmatpush1.msra.mxu0 %v647
    %1468 = vmatprep.subr.mxu0 0.0
    %1469 = vmatpush1.msra.mxu0 %v642
    %1470 = vmatprep.subr.mxu0 0.0
    %1471 = vmatpush1.msra.mxu0 %v637
    %1472 = vmatprep.subr.mxu0 0.0
    %1473 = vmatpush1.msra.mxu0 %v632
    %1474 = vmatprep.subr.mxu0 0.0
    %1475 = vmatpush2.msra.mxu0 0.0
    %1476 = vmatprep.subr.mxu0 0.0
    %1477 = vmatpush2.msra.mxu0 0.0
    %1478 = vmatprep.subr.mxu0 0.0
    %1479 = vmatpush2.msra.mxu0 0.0
    %1480 = vmatprep.subr.mxu0 0.0
    %1481 = vmatpush2.msra.mxu0 0.0
    %1482 = vmatprep.subr.mxu0 0.0
    %1483 = vmatpush2.msra.mxu0 0.0
    %1484 = vmatprep.subr.mxu0 0.0
    %1485 = vmatpush2.msra.mxu0 0.0
    %1486 = vmatprep.subr.mxu0 0.0
    %1487 = vmatpush2.msra.mxu0 0.0
    %1488 = vmatprep.subr.mxu0 0.0
    %1489 = vmatpush2.msra.mxu0 0.0
    %1490 = vmatprep.subr.mxu0 0.0
    %1491 = vmatpush2.msra.mxu0 0.0
    %1492 = vmatprep.subr.mxu0 0.0
    %1493 = vmatpush2.msra.mxu0 0.0
    %1494 = vmatprep.subr.mxu0 0.0
    %1495 = vmatpush2.msra.mxu0 0.0
    %1496 = vmatprep.subr.mxu0 0.0
    %1497 = vmatpush2.msra.mxu0 0.0
    %1498 = vmatprep.subr.mxu0 0.0
    %1499 = vmatpush2.msra.mxu0 0.0
    %1500 = vmatprep.subr.mxu0 0.0
    %1501 = vmatpush2.msra.mxu0 0.0
    %1502 = vmatprep.subr.mxu0 0.0
    %1503 = vmatpush2.msra.mxu0 0.0
    %1504 = vmatprep.subr.mxu0 0.0
    %1505 = vmatpush2.msra.mxu0 0.0
    %1506 = vmatprep.mubr.f32.mxu0 0.0
    %1507 = vmatmul.mubr.f32.gmra.mxu0 %v1431
    %v1508 = vpop.f32.mrf.mxu0
    %v1509 = vadd.f32 0.0, %v1508
    %v1510 = vpop.f32.mrf.mxu0
    %1511 = vmatprep.mubr.f32.mxu0 0.0
    %1512 = vmatmul.mubr.f32.gmra.mxu0 %v1434
    %v1513 = vpop.f32.mrf.mxu0
    %v1514 = vadd.f32 0.0, %v1513
    %v1515 = vpop.f32.mrf.mxu0
    %1516 = vmatprep.mubr.f32.mxu0 0.0
    %1517 = vmatmul.mubr.f32.gmra.mxu0 %v1437
    %v1518 = vpop.f32.mrf.mxu0
    %v1519 = vadd.f32 0.0, %v1518
    %v1520 = vpop.f32.mrf.mxu0
    %1521 = vmatprep.mubr.f32.mxu0 0.0
    %1522 = vmatmul.mubr.f32.gmra.mxu0 %v1440
    %v1523 = vpop.f32.mrf.mxu0
    %v1524 = vadd.f32 0.0, %v1523
    %v1525 = vpop.f32.mrf.mxu0
    %1526 = vdwg.mxu0
    %v1528 = vsel %vm695, %v1426, 0
    %v1531 = vsel %vm695, %v1427, 0
    %v1534 = vsel %vm695, %v1428, 0
    %v1537 = vsel %vm695, %v1429, 0
    %1539 = vmatprep.subr.mxu0 0.0
    %1540 = vmatpush1.msra.mxu0 0.0
    %1541 = vmatprep.subr.mxu0 0.0
    %1542 = vmatpush1.msra.mxu0 0.0
    %1543 = vmatprep.subr.mxu0 0.0
    %1544 = vmatpush1.msra.mxu0 0.0
    %1545 = vmatprep.subr.mxu0 0.0
    %1546 = vmatpush1.msra.mxu0 0.0
    %1547 = vmatprep.subr.mxu0 0.0
    %1548 = vmatpush1.msra.mxu0 0.0
    %1549 = vmatprep.subr.mxu0 0.0
    %1550 = vmatpush1.msra.mxu0 0.0
    %1551 = vmatprep.subr.mxu0 0.0
    %1552 = vmatpush1.msra.mxu0 %v1373
    %1553 = vmatprep.subr.mxu0 0.0
    %1554 = vmatpush1.msra.mxu0 %v1368
    %1555 = vmatprep.subr.mxu0 0.0
    %1556 = vmatpush1.msra.mxu0 %v1363
    %1557 = vmatprep.subr.mxu0 0.0
    %1558 = vmatpush1.msra.mxu0 %v1358
    %1559 = vmatprep.subr.mxu0 0.0
    %1560 = vmatpush1.msra.mxu0 %v1353
    %1561 = vmatprep.subr.mxu0 0.0
    %1562 = vmatpush1.msra.mxu0 %v1348
    %1563 = vmatprep.subr.mxu0 0.0
    %1564 = vmatpush1.msra.mxu0 %v1343
    %1565 = vmatprep.subr.mxu0 0.0
    %1566 = vmatpush1.msra.mxu0 %v1338
    %1567 = vmatprep.subr.mxu0 0.0
    %1568 = vmatpush1.msra.mxu0 %v1333
    %1569 = vmatprep.subr.mxu0 0.0
    %1570 = vmatpush1.msra.mxu0 %v1328
    %1571 = vmatprep.subr.mxu0 0.0
    %1572 = vmatpush2.msra.mxu0 0.0
    %1573 = vmatprep.subr.mxu0 0.0
    %1574 = vmatpush2.msra.mxu0 0.0
    %1575 = vmatprep.subr.mxu0 0.0
    %1576 = vmatpush2.msra.mxu0 0.0
    %1577 = vmatprep.subr.mxu0 0.0
    %1578 = vmatpush2.msra.mxu0 0.0
    %1579 = vmatprep.subr.mxu0 0.0
    %1580 = vmatpush2.msra.mxu0 0.0
    %1581 = vmatprep.subr.mxu0 0.0
    %1582 = vmatpush2.msra.mxu0 0.0
    %1583 = vmatprep.subr.mxu0 0.0
    %1584 = vmatpush2.msra.mxu0 0.0
    %1585 = vmatprep.subr.mxu0 0.0
    %1586 = vmatpush2.msra.mxu0 0.0
    %1587 = vmatprep.subr.mxu0 0.0
    %1588 = vmatpush2.msra.mxu0 0.0
    %1589 = vmatprep.subr.mxu0 0.0
    %1590 = vmatpush2.msra.mxu0 0.0
    %1591 = vmatprep.subr.mxu0 0.0
    %1592 = vmatpush2.msra.mxu0 0.0
    %1593 = vmatprep.subr.mxu0 0.0
    %1594 = vmatpush2.msra.mxu0 0.0
    %1595 = vmatprep.subr.mxu0 0.0
    %1596 = vmatpush2.msra.mxu0 0.0
    %1597 = vmatprep.subr.mxu0 0.0
    %1598 = vmatpush2.msra.mxu0 0.0
    %1599 = vmatprep.subr.mxu0 0.0
    %1600 = vmatpush2.msra.mxu0 0.0
    %1601 = vmatprep.subr.mxu0 0.0
    %1602 = vmatpush2.msra.mxu0 0.0
    %1603 = vmatprep.mubr.f32.mxu0 0.0
    %1604 = vmatmul.mubr.f32.gmra.mxu0 %v1528
    %v1605 = vpop.f32.mrf.mxu0
    %v1606 = vadd.f32 0.0, %v1605
    %v1607 = vpop.f32.mrf.mxu0
    %1608 = vmatprep.mubr.f32.mxu0 0.0
    %1609 = vmatmul.mubr.f32.gmra.mxu0 %v1531
    %v1610 = vpop.f32.mrf.mxu0
    %v1611 = vadd.f32 0.0, %v1610
    %v1612 = vpop.f32.mrf.mxu0
    %1613 = vmatprep.mubr.f32.mxu0 0.0
    %1614 = vmatmul.mubr.f32.gmra.mxu0 %v1534
    %v1615 = vpop.f32.mrf.mxu0
    %v1616 = vadd.f32 0.0, %v1615
    %v1617 = vpop.f32.mrf.mxu0
    %1618 = vmatprep.mubr.f32.mxu0 0.0
    %1619 = vmatmul.mubr.f32.gmra.mxu0 %v1537
    %v1620 = vpop.f32.mrf.mxu0
    %v1621 = vadd.f32 0.0, %v1620
    %v1622 = vpop.f32.mrf.mxu0
    %1623 = vdwg.mxu0
    %v1624 = vmul.f32 %v1509, %v1509
    %v1625 = vmul.f32 %v1514, %v1514
    %v1626 = vmul.f32 %v1519, %v1519
    %v1627 = vmul.f32 %v1524, %v1524
    %v1628 = vsel %vm540, %v1624, 0.0
    %1629 = vadd.xlane.f32.xlu0 %v1628
    %v1630 = vpop.xlane.xlu0 %1629
    %v1631 = vsel %vm540, %v1625, 0.0
    %1632 = vadd.xlane.f32.xlu0 %v1631
    %v1633 = vpop.xlane.xlu0 %1632
    %v1634 = vsel %vm540, %v1626, 0.0
    %1635 = vadd.xlane.f32.xlu0 %v1634
    %v1636 = vpop.xlane.xlu0 %1635
    %v1637 = vsel %vm540, %v1627, 0.0
    %1638 = vadd.xlane.f32.xlu0 %v1637
    %v1639 = vpop.xlane.xlu0 %1638
    %v1640 = vmax.f32 %v1630, 1e-24
    %v1641 = vmax.f32 %v1633, 1e-24
    %v1642 = vmax.f32 %v1636, 1e-24
    %v1643 = vmax.f32 %v1639, 1e-24
    %v1644 = vrsqrt.pop %v1640
    %v1645 = vrsqrt.pop %v1641
    %v1646 = vrsqrt.pop %v1642
    %v1647 = vrsqrt.pop %v1643
    %v1648 = vmul.f32 %v1509, %v1644
    %v1649 = vmul.f32 %v1514, %v1645
    %v1650 = vmul.f32 %v1519, %v1646
    %v1651 = vmul.f32 %v1524, %v1647
    %v1652 = vmul.f32 %v1606, %v1606
    %v1653 = vmul.f32 %v1611, %v1611
    %v1654 = vmul.f32 %v1616, %v1616
    %v1655 = vmul.f32 %v1621, %v1621
    %v1656 = vsel %vm540, %v1652, 0.0
    %1657 = vadd.xlane.f32.xlu0 %v1656
    %v1658 = vpop.xlane.xlu0 %1657
    %v1659 = vsel %vm540, %v1653, 0.0
    %1660 = vadd.xlane.f32.xlu0 %v1659
    %v1661 = vpop.xlane.xlu0 %1660
    %v1662 = vsel %vm540, %v1654, 0.0
    %1663 = vadd.xlane.f32.xlu0 %v1662
    %v1664 = vpop.xlane.xlu0 %1663
    %v1665 = vsel %vm540, %v1655, 0.0
    %1666 = vadd.xlane.f32.xlu0 %v1665
    %v1667 = vpop.xlane.xlu0 %1666
    %v1668 = vmax.f32 %v1658, 1e-24
    %v1669 = vmax.f32 %v1661, 1e-24
    %v1670 = vmax.f32 %v1664, 1e-24
    %v1671 = vmax.f32 %v1667, 1e-24
    %v1672 = vrsqrt.pop %v1668
    %v1673 = vrsqrt.pop %v1669
    %v1674 = vrsqrt.pop %v1670
    %v1675 = vrsqrt.pop %v1671
    %v1676 = vmul.f32 %v1606, %v1672
    %v1677 = vmul.f32 %v1611, %v1673
    %v1678 = vmul.f32 %v1616, %v1674
    %v1679 = vmul.f32 %v1621, %v1675
    %v1680 = vmul.f32 %v1648, %v1676
    %v1681 = vmul.f32 %v1649, %v1677
    %v1682 = vmul.f32 %v1650, %v1678
    %v1683 = vmul.f32 %v1651, %v1679
    %v1685 = vsel %vm540, %v1680, 0
    %v1688 = vsel %vm540, %v1681, 0
    %v1691 = vsel %vm540, %v1682, 0
    %v1694 = vsel %vm540, %v1683, 0
    %1696 = vmatprep.subr.mxu0 0.0
    %1697 = vmatpush1.msra.mxu0 0.0
    %1698 = vmatprep.subr.mxu0 0.0
    %1699 = vmatpush1.msra.mxu0 0.0
    %1700 = vmatprep.subr.mxu0 0.0
    %1701 = vmatpush1.msra.mxu0 0.0
    %1702 = vmatprep.subr.mxu0 0.0
    %1703 = vmatpush1.msra.mxu0 0.0
    %1704 = vmatprep.subr.mxu0 0.0
    %1705 = vmatpush1.msra.mxu0 0.0
    %1706 = vmatprep.subr.mxu0 0.0
    %1707 = vmatpush1.msra.mxu0 0.0
    %1708 = vmatprep.subr.mxu0 0.0
    %1709 = vmatpush1.msra.mxu0 0.0
    %1710 = vmatprep.subr.mxu0 0.0
    %1711 = vmatpush1.msra.mxu0 0.0
    %1712 = vmatprep.subr.mxu0 0.0
    %1713 = vmatpush1.msra.mxu0 0.0
    %1714 = vmatprep.subr.mxu0 0.0
    %1715 = vmatpush1.msra.mxu0 0.0
    %1716 = vmatprep.subr.mxu0 0.0
    %1717 = vmatpush1.msra.mxu0 0.0
    %1718 = vmatprep.subr.mxu0 0.0
    %1719 = vmatpush1.msra.mxu0 0.0
    %1720 = vmatprep.subr.mxu0 0.0
    %1721 = vmatpush1.msra.mxu0 1.0
    %1722 = vmatprep.subr.mxu0 0.0
    %1723 = vmatpush1.msra.mxu0 1.0
    %1724 = vmatprep.subr.mxu0 0.0
    %1725 = vmatpush1.msra.mxu0 1.0
    %1726 = vmatprep.subr.mxu0 0.0
    %1727 = vmatpush1.msra.mxu0 1.0
    %1728 = vmatprep.subr.mxu0 0.0
    %1729 = vmatpush2.msra.mxu0 0.0
    %1730 = vmatprep.subr.mxu0 0.0
    %1731 = vmatpush2.msra.mxu0 0.0
    %1732 = vmatprep.subr.mxu0 0.0
    %1733 = vmatpush2.msra.mxu0 0.0
    %1734 = vmatprep.subr.mxu0 0.0
    %1735 = vmatpush2.msra.mxu0 0.0
    %1736 = vmatprep.subr.mxu0 0.0
    %1737 = vmatpush2.msra.mxu0 0.0
    %1738 = vmatprep.subr.mxu0 0.0
    %1739 = vmatpush2.msra.mxu0 0.0
    %1740 = vmatprep.subr.mxu0 0.0
    %1741 = vmatpush2.msra.mxu0 0.0
    %1742 = vmatprep.subr.mxu0 0.0
    %1743 = vmatpush2.msra.mxu0 0.0
    %1744 = vmatprep.subr.mxu0 0.0
    %1745 = vmatpush2.msra.mxu0 0.0
    %1746 = vmatprep.subr.mxu0 0.0
    %1747 = vmatpush2.msra.mxu0 0.0
    %1748 = vmatprep.subr.mxu0 0.0
    %1749 = vmatpush2.msra.mxu0 0.0
    %1750 = vmatprep.subr.mxu0 0.0
    %1751 = vmatpush2.msra.mxu0 0.0
    %1752 = vmatprep.subr.mxu0 0.0
    %1753 = vmatpush2.msra.mxu0 0.0
    %1754 = vmatprep.subr.mxu0 0.0
    %1755 = vmatpush2.msra.mxu0 0.0
    %1756 = vmatprep.subr.mxu0 0.0
    %1757 = vmatpush2.msra.mxu0 0.0
    %1758 = vmatprep.subr.mxu0 0.0
    %1759 = vmatpush2.msra.mxu0 0.0
    %1760 = vmatprep.mubr.f32.mxu0 0.0
    %1761 = vmatmul.mubr.f32.gmra.mxu0 %v1685
    %v1762 = vpop.f32.mrf.mxu0
    %v1763 = vadd.f32 0.0, %v1762
    %v1764 = vpop.f32.mrf.mxu0
    %1765 = vmatprep.mubr.f32.mxu0 0.0
    %1766 = vmatmul.mubr.f32.gmra.mxu0 %v1688
    %v1767 = vpop.f32.mrf.mxu0
    %v1768 = vadd.f32 0.0, %v1767
    %v1769 = vpop.f32.mrf.mxu0
    %1770 = vmatprep.mubr.f32.mxu0 0.0
    %1771 = vmatmul.mubr.f32.gmra.mxu0 %v1691
    %v1772 = vpop.f32.mrf.mxu0
    %v1773 = vadd.f32 0.0, %v1772
    %v1774 = vpop.f32.mrf.mxu0
    %1775 = vmatprep.mubr.f32.mxu0 0.0
    %1776 = vmatmul.mubr.f32.gmra.mxu0 %v1694
    %v1777 = vpop.f32.mrf.mxu0
    %v1778 = vadd.f32 0.0, %v1777
    %v1779 = vpop.f32.mrf.mxu0
    %1780 = vdwg.mxu0
    %1781 = vst [vmem:[#allocation2] sm:$0xff] %v1763
    %1782 = vst [vmem:[#allocation2 + $0x8] sm:$0xff] %v1768
    %1783 = vst [vmem:[#allocation2 + $0x10] sm:$0xff] %v1773
    %1784 = vst [vmem:[#allocation2 + $0x18] sm:$0xff] %v1778
    // Predicated region
    $region26: #{tpu_custom_call.1} parent=1 // pred_check
      _
    $region27: #{tpu_custom_call.1} parent=1 // pred_check_branch
      %1786 = sbr.rel (0) target = $region29
    $region28: #{tpu_custom_call.1} parent=1 // pred_region
      %s1788 = ssub.s32 512, 512
      %1789 = vsyncadd [#allocation3], %s1788
      %s1790 = sshll.u32 [#allocation2], 4
      %s1791 = int_to_ptr.vmem [resolvable:$true] %s1790
      %1796 = dma.vmem_to_hbm [thread:$0]  %s1791, 512, %s6, [#allocation3], 128, 128, 8
    $region29: #{tpu_custom_call.1} parent=1 // pred_fallthru
      _
    // Predicated region
    $region30: #{tpu_custom_call.1} parent=1 // pred_check
      _
    $region31: #{tpu_custom_call.1} parent=1 // pred_check_branch
      %1798 = sbr.rel (0) target = $region33
    $region32: #{tpu_custom_call.1} parent=1 // pred_region
      %1799 = dma.done [#allocation3], 512
    $region33: #{tpu_custom_call.1} parent=1 // pred_fallthru
      _
    %1800 = vsyncpa [#allocation3], 1

</llo_original>
